<compile_context>
chip_gen: v5e
topology: v5e:2x2
jax: 0.10.0
libtpu: 0.0.40
codegen_flags: <defaults>
</compile_context>

<pallas_src>
import functools

import jax
import jax.numpy as jnp
import numpy as np
from jax.experimental import pallas as pl
from jax.experimental.pallas import tpu as pltpu


# ----------------------------------------------------------------------------
# Pallas kernel: one ResidualAttentionBlock for a tile of Bt batch elements
# ----------------------------------------------------------------------------
def _block_kernel(x_ref, mask_ref,
                  ln1_g_ref, ln1_b_ref, b_qkv_ref, b_out_ref,
                  ln2_g_ref, ln2_b_ref, b_fc_ref, b_proj_ref,
                  w_qkv_hbm, w_out_hbm, w_fc_hbm, w_proj_hbm,
                  o_ref,
                  w_qkv, w_out, w_fc, w_proj, o_scr,
                  *, n_head, eps, ffn_chunk):
    Bt, S, D = x_ref.shape
    hd = D // n_head
    N = Bt * S

    # ---- one-time weight residency (single-buffered VMEM) -------------------
    # Big weights arrive as raw HBM refs (memory_space=pl.ANY) and are DMA'd once
    # into VMEM scratch.  The guard uses the INNER ("arbitrary") grid axis so that
    # under megacore partitioning of the outer "parallel" axis every core executes
    # inner index 0 and fills its own private VMEM copy.
    @pl.when(pl.program_id(1) == 0)
    def _load_weights():
        pltpu.sync_copy(w_qkv_hbm, w_qkv)
        pltpu.sync_copy(w_out_hbm, w_out)
        pltpu.sync_copy(w_fc_hbm, w_fc)
        pltpu.sync_copy(w_proj_hbm, w_proj)

    x = x_ref[...].astype(jnp.float32).reshape(N, D)                  # (N, D) f32

    # Key-padding mask -> finite additive bias, kept at (Bt, 1, S); the add in the
    # head loop is a sublane broadcast (no (Bt, S, S) f32 buffer is materialized).
    pad = mask_ref[...] != 0
    neg = jnp.where(pad, jnp.float32(-1e30), jnp.float32(0.0))        # (Bt, 1, S)

    def layer_norm(v, g_ref, b_ref):
        g = g_ref[...].astype(jnp.float32)
        b = b_ref[...].astype(jnp.float32)
        mu = jnp.mean(v, axis=-1, keepdims=True)
        var = jnp.mean(jnp.square(v - mu), axis=-1, keepdims=True)
        return (v - mu) * jax.lax.rsqrt(var + eps) * g + b

    # ---- attention branch: x + out_proj(MHA(ln_1(x))) ------------------------
    xn = layer_norm(x, ln1_g_ref, ln1_b_ref)
    # 1/sqrt(head_dim) is folded into the Q columns of w_qkv / b_qkv at
    # parameter-prep time, so there is no per-tile scale multiply here.
    qkv = (jnp.dot(xn.astype(jnp.bfloat16), w_qkv[...],
                   preferred_element_type=jnp.float32)
           + b_qkv_ref[...].astype(jnp.float32))                      # (N, 3D) f32

    # TODO(synk): attn_mask (additive/causal) path of nn.MultiheadAttention is not
    # supported; the module is constructed with attn_mask=None.
    for h in range(n_head):                       # static loop, static lane slices
        lo = h * hd
        qh = qkv[:, lo:lo + hd].astype(jnp.bfloat16).reshape(Bt, S, hd)
        kh = qkv[:, D + lo:D + lo + hd].astype(jnp.bfloat16).reshape(Bt, S, hd)
        vh = qkv[:, 2 * D + lo:2 * D + lo + hd].astype(jnp.bfloat16).reshape(Bt, S, hd)
        # QK^T without materializing a K transpose (contract last dims, batch Bt).
        s = jnp.einsum('bqd,bkd->bqk', qh, kh,
                       preferred_element_type=jnp.float32) + neg      # (Bt, S, S)
        m = jnp.max(s, axis=-1, keepdims=True)
        e = jnp.exp(s - m)
        p = e * pl.reciprocal(jnp.sum(e, axis=-1, keepdims=True), approx=True)
        oh = jnp.einsum('bqk,bkd->bqd', p.astype(jnp.bfloat16), vh,
                        preferred_element_type=jnp.float32)           # (Bt, S, hd)
        # Drop the head into its lane slot of the (N, D) bf16 scratch so the output
        # projection runs as ONE full-contraction-depth (K = D) MXU matmul.
        o_scr[:, lo:lo + hd] = oh.reshape(N, hd).astype(o_scr.dtype)

    attn = (jnp.dot(o_scr[...], w_out[...], preferred_element_type=jnp.float32)
            + b_out_ref[...].astype(jnp.float32))
    x = x + attn

    # ---- MLP branch: x + c_proj(QuickGELU(c_fc(ln_2(x)))) --------------------
    xn2 = layer_norm(x, ln2_g_ref, ln2_b_ref).astype(jnp.bfloat16)
    hidden = w_fc.shape[1]
    mlp = jnp.zeros((N, D), jnp.float32)
    for c0 in range(0, hidden, ffn_chunk):        # chunked hidden: no (N, 4D) f32
        hblk = (jnp.dot(xn2, w_fc[:, c0:c0 + ffn_chunk],
                        preferred_element_type=jnp.float32)
                + b_fc_ref[:, c0:c0 + ffn_chunk].astype(jnp.float32))
        hblk = hblk * jax.nn.sigmoid(1.702 * hblk)                    # QuickGELU (f32)
        mlp = mlp + jnp.dot(hblk.astype(jnp.bfloat16),
                            w_proj[c0:c0 + ffn_chunk, :],
                            preferred_element_type=jnp.float32)
    mlp = mlp + b_proj_ref[...].astype(jnp.float32)

    o_ref[...] = (x + mlp).reshape(Bt, S, D).astype(o_ref.dtype)


# ----------------------------------------------------------------------------
# Tiling / VMEM helpers (generation-aware)
# ----------------------------------------------------------------------------
def _vmem_capacity_bytes():
    try:
        cap = int(pltpu.get_tpu_info().vmem_capacity_bytes)
        if cap > 0:
            return cap
    except Exception:
        pass
    return 64 << 20          # conservative default (v7x size): safe on every gen


def _ffn_chunk_size(hidden):
    if hidden <= 1024:
        return hidden
    for c in (1024, 512, 256, 128):
        if hidden % c == 0:
            return c
    return hidden


def _tile_bytes(bt, S, D, ffn_chunk):
    n = bt * S
    io = 2 * 2 * n * D * 4            # x-in + out tiles, double-buffered
    msk = 2 * bt * S * 4
    qkv = n * 3 * D * 4               # (N, 3D) f32
    act = 3 * n * D * 4               # xn / residual / mlp accumulator
    attn = 3 * bt * S * S * 4         # one head's s / e / p live at once
    oscr = n * D * 2                  # bf16 per-head output scratch
    ffn = 2 * n * ffn_chunk * 4       # c_fc slab + QuickGELU slab
    return io + msk + qkv + act + attn + oscr + ffn


def _pick_tiling(B, S, D, ffn_chunk, tile_budget, max_tile=32):
    best = 1
    for bt in range(1, min(B, max_tile) + 1):
        if B % bt:
            continue
        if _tile_bytes(bt, S, D, ffn_chunk) > tile_budget:
            continue
        if B > 1 and B // bt < 2:      # keep >= 2 grid steps so megacore has work
            continue
        best = bt
    g = B // best
    if g >= 2 and g % 2 == 0:
        return best, 2, g // 2         # (Bt, parallel extent, arbitrary extent)
    return best, 1, g


# ----------------------------------------------------------------------------
# Wrapper: one residual block over the full batch
# ----------------------------------------------------------------------------
def residual_attention_block(x_bsd, mask_b1s, prep, n_head, eps=1e-5):
    B, S, D = x_bsd.shape
    (ln1_g, ln1_b, w_qkv, b_qkv, w_out, b_out,
     ln2_g, ln2_b, w_fc, b_fc, w_proj, b_proj) = prep

    small_params = (ln1_g, ln1_b, b_qkv, b_out, ln2_g, ln2_b, b_fc, b_proj)
    big_weights = (w_qkv, w_out, w_fc, w_proj)

    hidden = w_fc.shape[1]
    ffn_chunk = _ffn_chunk_size(hidden)

    vmem_cap = _vmem_capacity_bytes()
    big_bytes = sum(int(np.prod(w.shape)) * w.dtype.itemsize for w in big_weights)
    small_bytes = 2 * sum(int(np.prod(p.shape)) * p.dtype.itemsize for p in small_params)
    resident = big_bytes + small_bytes
    tile_budget = max(vmem_cap - (8 << 20) - resident, 4 << 20)

    Bt, P, Q = _pick_tiling(B, S, D, ffn_chunk, tile_budget)
    N = Bt * S

    kernel = functools.partial(_block_kernel, n_head=n_head, eps=eps,
                               ffn_chunk=ffn_chunk)

    def tile3(i, j):
        return (i * Q + j, 0, 0)

    def full_spec(a):
        nd = a.ndim
        return pl.BlockSpec(a.shape, lambda i, j, _nd=nd: (0,) * _nd)

    in_specs = (
        [pl.BlockSpec((Bt, S, D), tile3),            # x tile
         pl.BlockSpec((Bt, 1, S), tile3)]            # key-padding mask (int32)
        + [full_spec(a) for a in small_params]       # LN params + biases (tiny)
        + [pl.BlockSpec(memory_space=pl.ANY)] * len(big_weights)  # raw HBM weights
    )

    # Explicit VMEM budget: >= 8 MiB headroom under physical capacity.
    vmem_limit = int(max(vmem_cap - (8 << 20), 32 << 20))

    flops = 2 * B * S * 12 * D * D + 4 * B * S * S * D
    transcendentals = B * n_head * S * S + 4 * B * S * D
    bytes_accessed = big_bytes + small_bytes // 2 + (2 * B * S * D + B * S) * 4
    cost = pl.CostEstimate(flops=flops, transcendentals=transcendentals,
                           bytes_accessed=bytes_accessed)

    return pl.pallas_call(
        kernel,
        out_shape=jax.ShapeDtypeStruct((B, S, D), x_bsd.dtype),
        grid=(P, Q),
        in_specs=in_specs,
        out_specs=pl.BlockSpec((Bt, S, D), tile3),
        scratch_shapes=[
            pltpu.VMEM(w_qkv.shape, w_qkv.dtype),    # single-buffered weights
            pltpu.VMEM(w_out.shape, w_out.dtype),
            pltpu.VMEM(w_fc.shape, w_fc.dtype),
            pltpu.VMEM(w_proj.shape, w_proj.dtype),
            pltpu.VMEM((N, D), jnp.bfloat16),        # per-head output scratch
        ],
        compiler_params=pltpu.CompilerParams(
            dimension_semantics=("parallel", "arbitrary"),
            vmem_limit_bytes=vmem_limit),
        cost_estimate=cost,
    )(x_bsd, mask_b1s, *small_params, *big_weights)


# ----------------------------------------------------------------------------
# Parameter preparation (one-time bf16 cast + 1/sqrt(hd) fold) and forward pass
# ----------------------------------------------------------------------------
def prepare_layer_params(raw, n_head):
    (ln1_g, ln1_b, w_qkv, b_qkv, w_out, b_out,
     ln2_g, ln2_b, w_fc, b_fc, w_proj, b_proj) = raw
    D = w_out.shape[0]
    hd = D // n_head
    scale = jnp.float32(1.0 / np.sqrt(hd))
    # Fold the attention scale into the Q columns of the in-projection.
    col_scale = jnp.concatenate([jnp.full((D,), scale, jnp.float32),
                                 jnp.ones((2 * D,), jnp.float32)])[None, :]
    return (
        ln1_g.astype(jnp.float32), ln1_b.astype(jnp.float32),
        (w_qkv.astype(jnp.float32) * col_scale).astype(jnp.bfloat16),
        b_qkv.astype(jnp.float32) * col_scale,
        w_out.astype(jnp.bfloat16), b_out.astype(jnp.float32),
        ln2_g.astype(jnp.float32), ln2_b.astype(jnp.float32),
        w_fc.astype(jnp.bfloat16), b_fc.astype(jnp.float32),
        w_proj.astype(jnp.bfloat16), b_proj.astype(jnp.float32),
    )


def prepare_transformer_params(layer_params, n_head):
    return [prepare_layer_params(p, n_head) for p in layer_params]


def transformer_forward(x_sbd, padding_mask_bs, prepared_layer_params, n_head):
    """x: (seq, batch, width); padding_mask: (batch, seq) bool. Returns (x, padding_mask)."""
    x = jnp.transpose(x_sbd, (1, 0, 2))                  # -> (batch, seq, width)
    B, S, _ = x.shape
    mask = padding_mask_bs.astype(jnp.int32).reshape(B, 1, S)
    for p in prepared_layer_params:
        x = residual_attention_block(x, mask, p, n_head)
    return jnp.transpose(x, (1, 0, 2)), padding_mask_bs


# ----------------------------------------------------------------------------
# Deterministic parameter init (synthetic weights; shapes follow nn.Module.__init__)
# ----------------------------------------------------------------------------
def init_transformer_params(key, width, layers):
    D = width
    params = []
    for l in range(layers):
        ks = jax.random.split(jax.random.fold_in(key, l), 4)
        p = (
            jnp.ones((1, D), jnp.float32),                                   # ln_1 gamma
            jnp.zeros((1, D), jnp.float32),                                  # ln_1 beta
            0.02 * jax.random.normal(ks[0], (D, 3 * D), jnp.float32),        # in_proj W^T
            jnp.zeros((1, 3 * D), jnp.float32),                              # in_proj b
            0.02 * jax.random.normal(ks[1], (D, D), jnp.float32),            # out_proj W^T
            jnp.zeros((1, D), jnp.float32),                                  # out_proj b
            jnp.ones((1, D), jnp.float32),                                   # ln_2 gamma
            jnp.zeros((1, D), jnp.float32),                                  # ln_2 beta
            0.02 * jax.random.normal(ks[2], (D, 4 * D), jnp.float32),        # c_fc W^T
            jnp.zeros((1, 4 * D), jnp.float32),                              # c_fc b
            0.02 * jax.random.normal(ks[3], (4 * D, D), jnp.float32),        # c_proj W^T
            jnp.zeros((1, D), jnp.float32),                                  # c_proj b
        )
        params.append(p)
    return params


# ----------------------------------------------------------------------------
# Pure-JAX reference (mirrors the kernel's bf16 matmul / f32 accumulation numerics)
# ----------------------------------------------------------------------------
def _reference_forward(x_sbd, padding_mask_bs, layer_params, n_head, eps=1e-5):
    x = jnp.transpose(x_sbd, (1, 0, 2)).astype(jnp.float32)   # (B, S, D)
    B, S, D = x.shape
    hd = D // n_head
    scale = float(1.0 / np.sqrt(hd))
    pad = padding_mask_bs.astype(bool)
    bias = jnp.where(pad[:, None, None, :], -1e30, 0.0).astype(jnp.float32)

    def ln(v, g, b):
        mu = v.mean(-1, keepdims=True)
        var = ((v - mu) ** 2).mean(-1, keepdims=True)
        return (v - mu) * jax.lax.rsqrt(var + eps) * g + b

    def mm(a, w, b):
        return jnp.dot(a.astype(jnp.bfloat16), w.astype(jnp.bfloat16),
                       preferred_element_type=jnp.float32) + b

    for (g1, b1, wq, bq, wo, bo, g2, b2, wf, bfc, wp, bp) in layer_params:
        xn = ln(x, g1, b1)
        qkv = mm(xn.reshape(B * S, D), wq, bq).reshape(B, S, 3 * D)
        q = (qkv[..., :D] * scale).reshape(B, S, n_head, hd).transpose(0, 2, 1, 3)
        k = qkv[..., D:2 * D].reshape(B, S, n_head, hd).transpose(0, 2, 1, 3)
        v = qkv[..., 2 * D:].reshape(B, S, n_head, hd).transpose(0, 2, 1, 3)
        s = jnp.einsum('bhqd,bhkd->bhqk', q.astype(jnp.bfloat16), k.astype(jnp.bfloat16),
                       preferred_element_type=jnp.float32) + bias
        m = s.max(-1, keepdims=True)
        e = jnp.exp(s - m)
        p = e / e.sum(-1, keepdims=True)
        o = jnp.einsum('bhqk,bhkd->bhqd', p.astype(jnp.bfloat16), v.astype(jnp.bfloat16),
                       preferred_element_type=jnp.float32)
        o = o.transpose(0, 2, 1, 3).reshape(B, S, D)
        x = x + mm(o.reshape(B * S, D), wo, bo).reshape(B, S, D)
        h = mm(ln(x, g2, b2).reshape(B * S, D), wf, bfc)
        h = h * jax.nn.sigmoid(1.702 * h)
        x = x + mm(h, wp, bp).reshape(B, S, D)
    return jnp.transpose(x, (1, 0, 2))


if __name__ == "__main__":
    width, layers, heads = 32, 2, 4
    seq, batch = 8, 2

    key = jax.random.PRNGKey(0)
    kx, kp = jax.random.split(key)
    x = jax.random.normal(kx, (seq, batch, width), jnp.float32)       # (seq, batch, width)
    padding_mask = jnp.zeros((batch, seq), jnp.bool_)
    padding_mask = padding_mask.at[1, -2:].set(True)                  # pad last 2 keys of batch 1

    raw_params = init_transformer_params(kp, width, layers)
    prepared = prepare_transformer_params(raw_params, heads)          # one-time bf16 + scale fold

    out, out_mask = transformer_forward(x, padding_mask, prepared, heads)
    out = jax.block_until_ready(out)

    ref = _reference_forward(x, padding_mask, raw_params, heads)
    np.testing.assert_allclose(np.asarray(out), np.asarray(ref), rtol=2e-2, atol=2e-2)
    assert out.shape == (seq, batch, width)
    assert bool(jnp.all(out_mask == padding_mask))

    print("KERNEL_OK")
</pallas_src>

<mosaic_0001>
module attributes {stable_mosaic.version = 11 : i64} {
  func.func @_block_kernel(%arg0: i32, %arg1: i32, %arg2: memref<1x8x32xf32, #tpu.memory_space<vmem>>, %arg3: memref<1x1x8xi32, #tpu.memory_space<vmem>>, %arg4: memref<1x32xf32, #tpu.memory_space<vmem>>, %arg5: memref<1x32xf32, #tpu.memory_space<vmem>>, %arg6: memref<1x96xf32, #tpu.memory_space<vmem>>, %arg7: memref<1x32xf32, #tpu.memory_space<vmem>>, %arg8: memref<1x32xf32, #tpu.memory_space<vmem>>, %arg9: memref<1x32xf32, #tpu.memory_space<vmem>>, %arg10: memref<1x128xf32, #tpu.memory_space<vmem>>, %arg11: memref<1x32xf32, #tpu.memory_space<vmem>>, %arg12: memref<32x96xbf16, #tpu.memory_space<any>>, %arg13: memref<32x32xbf16, #tpu.memory_space<any>>, %arg14: memref<32x128xbf16, #tpu.memory_space<any>>, %arg15: memref<128x32xbf16, #tpu.memory_space<any>>, %arg16: memref<1x8x32xf32, #tpu.memory_space<vmem>>, %arg17: memref<32x96xbf16, #tpu.memory_space<vmem>>, %arg18: memref<32x32xbf16, #tpu.memory_space<vmem>>, %arg19: memref<32x128xbf16, #tpu.memory_space<vmem>>, %arg20: memref<128x32xbf16, #tpu.memory_space<vmem>>, %arg21: memref<8x32xbf16, #tpu.memory_space<vmem>>) attributes {dimension_semantics = [#tpu.dimension_semantics<parallel>, #tpu.dimension_semantics<arbitrary>], iteration_bounds = array<i64: 2, 1>, scalar_prefetch = 0 : i64, scratch_operands = 5 : i64, tpu.core_type = #tpu.core_type<tc>, window_params = [{transform_indices = @transform_0, window_bounds = array<i64: 1, 8, 32>}, {transform_indices = @transform_1, window_bounds = array<i64: 1, 1, 8>}, {pipeline_mode = #tpu.pipeline_mode<synchronous>, transform_indices = @transform_2, window_bounds = array<i64: 1, 32>}, {pipeline_mode = #tpu.pipeline_mode<synchronous>, transform_indices = @transform_3, window_bounds = array<i64: 1, 32>}, {pipeline_mode = #tpu.pipeline_mode<synchronous>, transform_indices = @transform_4, window_bounds = array<i64: 1, 96>}, {pipeline_mode = #tpu.pipeline_mode<synchronous>, transform_indices = @transform_5, window_bounds = array<i64: 1, 32>}, {pipeline_mode = #tpu.pipeline_mode<synchronous>, transform_indices = @transform_6, window_bounds = array<i64: 1, 32>}, {pipeline_mode = #tpu.pipeline_mode<synchronous>, transform_indices = @transform_7, window_bounds = array<i64: 1, 32>}, {pipeline_mode = #tpu.pipeline_mode<synchronous>, transform_indices = @transform_8, window_bounds = array<i64: 1, 128>}, {pipeline_mode = #tpu.pipeline_mode<synchronous>, transform_indices = @transform_9, window_bounds = array<i64: 1, 32>}, {}, {}, {}, {}, {transform_indices = @transform_14, window_bounds = array<i64: 1, 8, 32>}]} {
    %c0_i32 = arith.constant 0 : i32
    %0 = arith.cmpi eq, %arg1, %c0_i32 : i32
    %1 = arith.extui %0 : i1 to i32
    %c0_i32_0 = arith.constant 0 : i32
    %2 = arith.cmpi ne, %1, %c0_i32_0 : i32
    scf.if %2 {
      "tpu.region"() ({
        %205 = tpu.sem_alloc : memref<!tpu.dma_semaphore, #tpu.memory_space<semaphore_mem>>
        tpu.enqueue_dma source(%arg12 : memref<32x96xbf16, #tpu.memory_space<any>>) target(%arg17 : memref<32x96xbf16, #tpu.memory_space<vmem>>) target_semaphore(%205 : memref<!tpu.dma_semaphore, #tpu.memory_space<semaphore_mem>>)
        tpu.wait_dma2 semaphore(%205 : memref<!tpu.dma_semaphore, #tpu.memory_space<semaphore_mem>>) src(%arg12 : memref<32x96xbf16, #tpu.memory_space<any>>) dst(%arg17 : memref<32x96xbf16, #tpu.memory_space<vmem>>)
        tpu.yield
      }) : () -> ()
      "tpu.region"() ({
        %205 = tpu.sem_alloc : memref<!tpu.dma_semaphore, #tpu.memory_space<semaphore_mem>>
        tpu.enqueue_dma source(%arg13 : memref<32x32xbf16, #tpu.memory_space<any>>) target(%arg18 : memref<32x32xbf16, #tpu.memory_space<vmem>>) target_semaphore(%205 : memref<!tpu.dma_semaphore, #tpu.memory_space<semaphore_mem>>)
        tpu.wait_dma2 semaphore(%205 : memref<!tpu.dma_semaphore, #tpu.memory_space<semaphore_mem>>) src(%arg13 : memref<32x32xbf16, #tpu.memory_space<any>>) dst(%arg18 : memref<32x32xbf16, #tpu.memory_space<vmem>>)
        tpu.yield
      }) : () -> ()
      "tpu.region"() ({
        %205 = tpu.sem_alloc : memref<!tpu.dma_semaphore, #tpu.memory_space<semaphore_mem>>
        tpu.enqueue_dma source(%arg14 : memref<32x128xbf16, #tpu.memory_space<any>>) target(%arg19 : memref<32x128xbf16, #tpu.memory_space<vmem>>) target_semaphore(%205 : memref<!tpu.dma_semaphore, #tpu.memory_space<semaphore_mem>>)
        tpu.wait_dma2 semaphore(%205 : memref<!tpu.dma_semaphore, #tpu.memory_space<semaphore_mem>>) src(%arg14 : memref<32x128xbf16, #tpu.memory_space<any>>) dst(%arg19 : memref<32x128xbf16, #tpu.memory_space<vmem>>)
        tpu.yield
      }) : () -> ()
      "tpu.region"() ({
        %205 = tpu.sem_alloc : memref<!tpu.dma_semaphore, #tpu.memory_space<semaphore_mem>>
        tpu.enqueue_dma source(%arg15 : memref<128x32xbf16, #tpu.memory_space<any>>) target(%arg20 : memref<128x32xbf16, #tpu.memory_space<vmem>>) target_semaphore(%205 : memref<!tpu.dma_semaphore, #tpu.memory_space<semaphore_mem>>)
        tpu.wait_dma2 semaphore(%205 : memref<!tpu.dma_semaphore, #tpu.memory_space<semaphore_mem>>) src(%arg15 : memref<128x32xbf16, #tpu.memory_space<any>>) dst(%arg20 : memref<128x32xbf16, #tpu.memory_space<vmem>>)
        tpu.yield
      }) : () -> ()
    } else {
    }
    %c0 = arith.constant 0 : index
    %c0_1 = arith.constant 0 : index
    %c0_2 = arith.constant 0 : index
    %3 = vector.load %arg2[%c0, %c0_1, %c0_2] : memref<1x8x32xf32, #tpu.memory_space<vmem>>, vector<1x8x32xf32>
    %4 = vector.shape_cast %3 : vector<1x8x32xf32> to vector<8x32xf32>
    %c0_3 = arith.constant 0 : index
    %c0_4 = arith.constant 0 : index
    %c0_5 = arith.constant 0 : index
    %5 = vector.load %arg3[%c0_3, %c0_4, %c0_5] : memref<1x1x8xi32, #tpu.memory_space<vmem>>, vector<1x1x8xi32>
    %c0_i32_6 = arith.constant 0 : i32
    %6 = vector.broadcast %c0_i32_6 : i32 to vector<1x1x8xi32>
    %7 = arith.cmpi ne, %5, %6 : vector<1x1x8xi32>
    %cst = arith.constant -1.000000e+30 : f32
    %cst_7 = arith.constant 0.000000e+00 : f32
    %8 = vector.broadcast %cst : f32 to vector<1x1x8xf32>
    %9 = vector.broadcast %cst_7 : f32 to vector<1x1x8xf32>
    %10 = arith.select %7, %8, %9 : vector<1x1x8xi1>, vector<1x1x8xf32>
    %c0_8 = arith.constant 0 : index
    %c0_9 = arith.constant 0 : index
    %11 = vector.load %arg4[%c0_8, %c0_9] : memref<1x32xf32, #tpu.memory_space<vmem>>, vector<1x32xf32>
    %c0_10 = arith.constant 0 : index
    %c0_11 = arith.constant 0 : index
    %12 = vector.load %arg5[%c0_10, %c0_11] : memref<1x32xf32, #tpu.memory_space<vmem>>, vector<1x32xf32>
    %cst_12 = arith.constant dense<0.000000e+00> : vector<8xf32>
    %13 = vector.multi_reduction <add>, %4, %cst_12 [1] : vector<8x32xf32> to vector<8xf32>
    %14 = vector.shape_cast %13 : vector<8xf32> to vector<8x1xf32>
    %cst_13 = arith.constant 3.200000e+01 : f32
    %15 = vector.broadcast %cst_13 : f32 to vector<8x1xf32>
    %16 = arith.divf %14, %15 : vector<8x1xf32>
    %17 = vector.broadcast %16 : vector<8x1xf32> to vector<8x32xf32>
    %18 = arith.subf %4, %17 : vector<8x32xf32>
    %19 = arith.mulf %18, %18 : vector<8x32xf32>
    %cst_14 = arith.constant dense<0.000000e+00> : vector<8xf32>
    %20 = vector.multi_reduction <add>, %19, %cst_14 [1] : vector<8x32xf32> to vector<8xf32>
    %21 = vector.shape_cast %20 : vector<8xf32> to vector<8x1xf32>
    %cst_15 = arith.constant 3.200000e+01 : f32
    %22 = vector.broadcast %cst_15 : f32 to vector<8x1xf32>
    %23 = arith.divf %21, %22 : vector<8x1xf32>
    %24 = vector.broadcast %16 : vector<8x1xf32> to vector<8x32xf32>
    %25 = arith.subf %4, %24 : vector<8x32xf32>
    %cst_16 = arith.constant 9.99999974E-6 : f32
    %26 = vector.broadcast %cst_16 : f32 to vector<8x1xf32>
    %27 = arith.addf %23, %26 : vector<8x1xf32>
    %28 = math.rsqrt %27 : vector<8x1xf32>
    %29 = vector.broadcast %28 : vector<8x1xf32> to vector<8x32xf32>
    %30 = arith.mulf %25, %29 : vector<8x32xf32>
    %31 = vector.broadcast %11 : vector<1x32xf32> to vector<8x32xf32>
    %32 = arith.mulf %30, %31 : vector<8x32xf32>
    %33 = vector.broadcast %12 : vector<1x32xf32> to vector<8x32xf32>
    %34 = arith.addf %32, %33 : vector<8x32xf32>
    %35 = arith.truncf %34 : vector<8x32xf32> to vector<8x32xbf16>
    %c0_17 = arith.constant 0 : index
    %c0_18 = arith.constant 0 : index
    %36 = vector.load %arg17[%c0_17, %c0_18] : memref<32x96xbf16, #tpu.memory_space<vmem>>, vector<32x96xbf16>
    %cst_19 = arith.constant dense<0.000000e+00> : vector<8x96xf32>
    %37 = tpu.matmul %35, %36, %cst_19 {dimension_numbers = #tpu.dot_dimension_numbers<[1], [0], [0], [1], [0, 0, 1, 1], [], []>} : vector<8x32xbf16>, vector<32x96xbf16>, vector<8x96xf32> -> vector<8x96xf32>
    %c0_20 = arith.constant 0 : index
    %c0_21 = arith.constant 0 : index
    %38 = vector.load %arg6[%c0_20, %c0_21] : memref<1x96xf32, #tpu.memory_space<vmem>>, vector<1x96xf32>
    %39 = vector.broadcast %38 : vector<1x96xf32> to vector<8x96xf32>
    %40 = arith.addf %37, %39 : vector<8x96xf32>
    %41 = vector.extract_strided_slice %40 {offsets = [0, 0], sizes = [8, 8], strides = [1, 1]} : vector<8x96xf32> to vector<8x8xf32>
    %42 = arith.truncf %41 : vector<8x8xf32> to vector<8x8xbf16>
    %43 = vector.shape_cast %42 : vector<8x8xbf16> to vector<1x8x8xbf16>
    %44 = vector.extract_strided_slice %40 {offsets = [0, 32], sizes = [8, 8], strides = [1, 1]} : vector<8x96xf32> to vector<8x8xf32>
    %45 = arith.truncf %44 : vector<8x8xf32> to vector<8x8xbf16>
    %46 = vector.shape_cast %45 : vector<8x8xbf16> to vector<1x8x8xbf16>
    %47 = vector.extract_strided_slice %40 {offsets = [0, 64], sizes = [8, 8], strides = [1, 1]} : vector<8x96xf32> to vector<8x8xf32>
    %48 = arith.truncf %47 : vector<8x8xf32> to vector<8x8xbf16>
    %49 = vector.shape_cast %48 : vector<8x8xbf16> to vector<1x8x8xbf16>
    "tpu.trace_start"() <{level = 10 : i32, message = "bqd,bkd->bqk"}> : () -> ()
    %cst_22 = arith.constant dense<0.000000e+00> : vector<1x8x8xf32>
    %50 = tpu.matmul %43, %46, %cst_22 {dimension_numbers = #tpu.dot_dimension_numbers<[2], [2], [1], [1], [0, 0, 0, 1, 1, 1], [0], [0]>} : vector<1x8x8xbf16>, vector<1x8x8xbf16>, vector<1x8x8xf32> -> vector<1x8x8xf32>
    "tpu.trace_stop"() : () -> ()
    %51 = vector.broadcast %10 : vector<1x1x8xf32> to vector<1x8x8xf32>
    %52 = arith.addf %50, %51 : vector<1x8x8xf32>
    %cst_23 = arith.constant dense<0xFF800000> : vector<1x8xf32>
    %53 = vector.multi_reduction <maximumf>, %52, %cst_23 [2] : vector<1x8x8xf32> to vector<1x8xf32>
    %54 = vector.shape_cast %53 : vector<1x8xf32> to vector<1x8x1xf32>
    %55 = vector.broadcast %54 : vector<1x8x1xf32> to vector<1x8x8xf32>
    %56 = arith.subf %52, %55 : vector<1x8x8xf32>
    %57 = math.exp %56 : vector<1x8x8xf32>
    %cst_24 = arith.constant dense<0.000000e+00> : vector<1x8xf32>
    %58 = vector.multi_reduction <add>, %57, %cst_24 [2] : vector<1x8x8xf32> to vector<1x8xf32>
    %59 = vector.shape_cast %58 : vector<1x8xf32> to vector<1x8x1xf32>
    %60 = tpu.reciprocal %59 {approx = true} : vector<1x8x1xf32> -> vector<1x8x1xf32>
    %61 = vector.broadcast %60 : vector<1x8x1xf32> to vector<1x8x8xf32>
    %62 = arith.mulf %57, %61 : vector<1x8x8xf32>
    %63 = arith.truncf %62 : vector<1x8x8xf32> to vector<1x8x8xbf16>
    "tpu.trace_start"() <{level = 10 : i32, message = "bqk,bkd->bqd"}> : () -> ()
    %cst_25 = arith.constant dense<0.000000e+00> : vector<1x8x8xf32>
    %64 = tpu.matmul %63, %49, %cst_25 {dimension_numbers = #tpu.dot_dimension_numbers<[2], [1], [1], [2], [0, 0, 0, 1, 1, 2], [0], [0]>} : vector<1x8x8xbf16>, vector<1x8x8xbf16>, vector<1x8x8xf32> -> vector<1x8x8xf32>
    "tpu.trace_stop"() : () -> ()
    %65 = vector.shape_cast %64 : vector<1x8x8xf32> to vector<8x8xf32>
    %66 = arith.truncf %65 : vector<8x8xf32> to vector<8x8xbf16>
    %c0_26 = arith.constant 0 : index
    %c0_27 = arith.constant 0 : index
    %67 = vector.load %arg21[%c0_26, %c0_27] : memref<8x32xbf16, #tpu.memory_space<vmem>>, vector<8x8xbf16>
    tpu.vector_store %arg21[%c0_26, %c0_27], %66 {strides = array<i32>} : memref<8x32xbf16, #tpu.memory_space<vmem>>, vector<8x8xbf16>,
    %68 = vector.extract_strided_slice %40 {offsets = [0, 8], sizes = [8, 8], strides = [1, 1]} : vector<8x96xf32> to vector<8x8xf32>
    %69 = arith.truncf %68 : vector<8x8xf32> to vector<8x8xbf16>
    %70 = vector.shape_cast %69 : vector<8x8xbf16> to vector<1x8x8xbf16>
    %71 = vector.extract_strided_slice %40 {offsets = [0, 40], sizes = [8, 8], strides = [1, 1]} : vector<8x96xf32> to vector<8x8xf32>
    %72 = arith.truncf %71 : vector<8x8xf32> to vector<8x8xbf16>
    %73 = vector.shape_cast %72 : vector<8x8xbf16> to vector<1x8x8xbf16>
    %74 = vector.extract_strided_slice %40 {offsets = [0, 72], sizes = [8, 8], strides = [1, 1]} : vector<8x96xf32> to vector<8x8xf32>
    %75 = arith.truncf %74 : vector<8x8xf32> to vector<8x8xbf16>
    %76 = vector.shape_cast %75 : vector<8x8xbf16> to vector<1x8x8xbf16>
    "tpu.trace_start"() <{level = 10 : i32, message = "bqd,bkd->bqk"}> : () -> ()
    %cst_28 = arith.constant dense<0.000000e+00> : vector<1x8x8xf32>
    %77 = tpu.matmul %70, %73, %cst_28 {dimension_numbers = #tpu.dot_dimension_numbers<[2], [2], [1], [1], [0, 0, 0, 1, 1, 1], [0], [0]>} : vector<1x8x8xbf16>, vector<1x8x8xbf16>, vector<1x8x8xf32> -> vector<1x8x8xf32>
    "tpu.trace_stop"() : () -> ()
    %78 = vector.broadcast %10 : vector<1x1x8xf32> to vector<1x8x8xf32>
    %79 = arith.addf %77, %78 : vector<1x8x8xf32>
    %cst_29 = arith.constant dense<0xFF800000> : vector<1x8xf32>
    %80 = vector.multi_reduction <maximumf>, %79, %cst_29 [2] : vector<1x8x8xf32> to vector<1x8xf32>
    %81 = vector.shape_cast %80 : vector<1x8xf32> to vector<1x8x1xf32>
    %82 = vector.broadcast %81 : vector<1x8x1xf32> to vector<1x8x8xf32>
    %83 = arith.subf %79, %82 : vector<1x8x8xf32>
    %84 = math.exp %83 : vector<1x8x8xf32>
    %cst_30 = arith.constant dense<0.000000e+00> : vector<1x8xf32>
    %85 = vector.multi_reduction <add>, %84, %cst_30 [2] : vector<1x8x8xf32> to vector<1x8xf32>
    %86 = vector.shape_cast %85 : vector<1x8xf32> to vector<1x8x1xf32>
    %87 = tpu.reciprocal %86 {approx = true} : vector<1x8x1xf32> -> vector<1x8x1xf32>
    %88 = vector.broadcast %87 : vector<1x8x1xf32> to vector<1x8x8xf32>
    %89 = arith.mulf %84, %88 : vector<1x8x8xf32>
    %90 = arith.truncf %89 : vector<1x8x8xf32> to vector<1x8x8xbf16>
    "tpu.trace_start"() <{level = 10 : i32, message = "bqk,bkd->bqd"}> : () -> ()
    %cst_31 = arith.constant dense<0.000000e+00> : vector<1x8x8xf32>
    %91 = tpu.matmul %90, %76, %cst_31 {dimension_numbers = #tpu.dot_dimension_numbers<[2], [1], [1], [2], [0, 0, 0, 1, 1, 2], [0], [0]>} : vector<1x8x8xbf16>, vector<1x8x8xbf16>, vector<1x8x8xf32> -> vector<1x8x8xf32>
    "tpu.trace_stop"() : () -> ()
    %92 = vector.shape_cast %91 : vector<1x8x8xf32> to vector<8x8xf32>
    %93 = arith.truncf %92 : vector<8x8xf32> to vector<8x8xbf16>
    %c0_32 = arith.constant 0 : index
    %c8 = arith.constant 8 : index
    %94 = vector.load %arg21[%c0_32, %c8] : memref<8x32xbf16, #tpu.memory_space<vmem>>, vector<8x8xbf16>
    tpu.vector_store %arg21[%c0_32, %c8], %93 {strides = array<i32>} : memref<8x32xbf16, #tpu.memory_space<vmem>>, vector<8x8xbf16>,
    %95 = vector.extract_strided_slice %40 {offsets = [0, 16], sizes = [8, 8], strides = [1, 1]} : vector<8x96xf32> to vector<8x8xf32>
    %96 = arith.truncf %95 : vector<8x8xf32> to vector<8x8xbf16>
    %97 = vector.shape_cast %96 : vector<8x8xbf16> to vector<1x8x8xbf16>
    %98 = vector.extract_strided_slice %40 {offsets = [0, 48], sizes = [8, 8], strides = [1, 1]} : vector<8x96xf32> to vector<8x8xf32>
    %99 = arith.truncf %98 : vector<8x8xf32> to vector<8x8xbf16>
    %100 = vector.shape_cast %99 : vector<8x8xbf16> to vector<1x8x8xbf16>
    %101 = vector.extract_strided_slice %40 {offsets = [0, 80], sizes = [8, 8], strides = [1, 1]} : vector<8x96xf32> to vector<8x8xf32>
    %102 = arith.truncf %101 : vector<8x8xf32> to vector<8x8xbf16>
    %103 = vector.shape_cast %102 : vector<8x8xbf16> to vector<1x8x8xbf16>
    "tpu.trace_start"() <{level = 10 : i32, message = "bqd,bkd->bqk"}> : () -> ()
    %cst_33 = arith.constant dense<0.000000e+00> : vector<1x8x8xf32>
    %104 = tpu.matmul %97, %100, %cst_33 {dimension_numbers = #tpu.dot_dimension_numbers<[2], [2], [1], [1], [0, 0, 0, 1, 1, 1], [0], [0]>} : vector<1x8x8xbf16>, vector<1x8x8xbf16>, vector<1x8x8xf32> -> vector<1x8x8xf32>
    "tpu.trace_stop"() : () -> ()
    %105 = vector.broadcast %10 : vector<1x1x8xf32> to vector<1x8x8xf32>
    %106 = arith.addf %104, %105 : vector<1x8x8xf32>
    %cst_34 = arith.constant dense<0xFF800000> : vector<1x8xf32>
    %107 = vector.multi_reduction <maximumf>, %106, %cst_34 [2] : vector<1x8x8xf32> to vector<1x8xf32>
    %108 = vector.shape_cast %107 : vector<1x8xf32> to vector<1x8x1xf32>
    %109 = vector.broadcast %108 : vector<1x8x1xf32> to vector<1x8x8xf32>
    %110 = arith.subf %106, %109 : vector<1x8x8xf32>
    %111 = math.exp %110 : vector<1x8x8xf32>
    %cst_35 = arith.constant dense<0.000000e+00> : vector<1x8xf32>
    %112 = vector.multi_reduction <add>, %111, %cst_35 [2] : vector<1x8x8xf32> to vector<1x8xf32>
    %113 = vector.shape_cast %112 : vector<1x8xf32> to vector<1x8x1xf32>
    %114 = tpu.reciprocal %113 {approx = true} : vector<1x8x1xf32> -> vector<1x8x1xf32>
    %115 = vector.broadcast %114 : vector<1x8x1xf32> to vector<1x8x8xf32>
    %116 = arith.mulf %111, %115 : vector<1x8x8xf32>
    %117 = arith.truncf %116 : vector<1x8x8xf32> to vector<1x8x8xbf16>
    "tpu.trace_start"() <{level = 10 : i32, message = "bqk,bkd->bqd"}> : () -> ()
    %cst_36 = arith.constant dense<0.000000e+00> : vector<1x8x8xf32>
    %118 = tpu.matmul %117, %103, %cst_36 {dimension_numbers = #tpu.dot_dimension_numbers<[2], [1], [1], [2], [0, 0, 0, 1, 1, 2], [0], [0]>} : vector<1x8x8xbf16>, vector<1x8x8xbf16>, vector<1x8x8xf32> -> vector<1x8x8xf32>
    "tpu.trace_stop"() : () -> ()
    %119 = vector.shape_cast %118 : vector<1x8x8xf32> to vector<8x8xf32>
    %120 = arith.truncf %119 : vector<8x8xf32> to vector<8x8xbf16>
    %c0_37 = arith.constant 0 : index
    %c16 = arith.constant 16 : index
    %121 = vector.load %arg21[%c0_37, %c16] : memref<8x32xbf16, #tpu.memory_space<vmem>>, vector<8x8xbf16>
    tpu.vector_store %arg21[%c0_37, %c16], %120 {strides = array<i32>} : memref<8x32xbf16, #tpu.memory_space<vmem>>, vector<8x8xbf16>,
    %122 = vector.extract_strided_slice %40 {offsets = [0, 24], sizes = [8, 8], strides = [1, 1]} : vector<8x96xf32> to vector<8x8xf32>
    %123 = arith.truncf %122 : vector<8x8xf32> to vector<8x8xbf16>
    %124 = vector.shape_cast %123 : vector<8x8xbf16> to vector<1x8x8xbf16>
    %125 = vector.extract_strided_slice %40 {offsets = [0, 56], sizes = [8, 8], strides = [1, 1]} : vector<8x96xf32> to vector<8x8xf32>
    %126 = arith.truncf %125 : vector<8x8xf32> to vector<8x8xbf16>
    %127 = vector.shape_cast %126 : vector<8x8xbf16> to vector<1x8x8xbf16>
    %128 = vector.extract_strided_slice %40 {offsets = [0, 88], sizes = [8, 8], strides = [1, 1]} : vector<8x96xf32> to vector<8x8xf32>
    %129 = arith.truncf %128 : vector<8x8xf32> to vector<8x8xbf16>
    %130 = vector.shape_cast %129 : vector<8x8xbf16> to vector<1x8x8xbf16>
    "tpu.trace_start"() <{level = 10 : i32, message = "bqd,bkd->bqk"}> : () -> ()
    %cst_38 = arith.constant dense<0.000000e+00> : vector<1x8x8xf32>
    %131 = tpu.matmul %124, %127, %cst_38 {dimension_numbers = #tpu.dot_dimension_numbers<[2], [2], [1], [1], [0, 0, 0, 1, 1, 1], [0], [0]>} : vector<1x8x8xbf16>, vector<1x8x8xbf16>, vector<1x8x8xf32> -> vector<1x8x8xf32>
    "tpu.trace_stop"() : () -> ()
    %132 = vector.broadcast %10 : vector<1x1x8xf32> to vector<1x8x8xf32>
    %133 = arith.addf %131, %132 : vector<1x8x8xf32>
    %cst_39 = arith.constant dense<0xFF800000> : vector<1x8xf32>
    %134 = vector.multi_reduction <maximumf>, %133, %cst_39 [2] : vector<1x8x8xf32> to vector<1x8xf32>
    %135 = vector.shape_cast %134 : vector<1x8xf32> to vector<1x8x1xf32>
    %136 = vector.broadcast %135 : vector<1x8x1xf32> to vector<1x8x8xf32>
    %137 = arith.subf %133, %136 : vector<1x8x8xf32>
    %138 = math.exp %137 : vector<1x8x8xf32>
    %cst_40 = arith.constant dense<0.000000e+00> : vector<1x8xf32>
    %139 = vector.multi_reduction <add>, %138, %cst_40 [2] : vector<1x8x8xf32> to vector<1x8xf32>
    %140 = vector.shape_cast %139 : vector<1x8xf32> to vector<1x8x1xf32>
    %141 = tpu.reciprocal %140 {approx = true} : vector<1x8x1xf32> -> vector<1x8x1xf32>
    %142 = vector.broadcast %141 : vector<1x8x1xf32> to vector<1x8x8xf32>
    %143 = arith.mulf %138, %142 : vector<1x8x8xf32>
    %144 = arith.truncf %143 : vector<1x8x8xf32> to vector<1x8x8xbf16>
    "tpu.trace_start"() <{level = 10 : i32, message = "bqk,bkd->bqd"}> : () -> ()
    %cst_41 = arith.constant dense<0.000000e+00> : vector<1x8x8xf32>
    %145 = tpu.matmul %144, %130, %cst_41 {dimension_numbers = #tpu.dot_dimension_numbers<[2], [1], [1], [2], [0, 0, 0, 1, 1, 2], [0], [0]>} : vector<1x8x8xbf16>, vector<1x8x8xbf16>, vector<1x8x8xf32> -> vector<1x8x8xf32>
    "tpu.trace_stop"() : () -> ()
    %146 = vector.shape_cast %145 : vector<1x8x8xf32> to vector<8x8xf32>
    %147 = arith.truncf %146 : vector<8x8xf32> to vector<8x8xbf16>
    %c0_42 = arith.constant 0 : index
    %c24 = arith.constant 24 : index
    %148 = vector.load %arg21[%c0_42, %c24] : memref<8x32xbf16, #tpu.memory_space<vmem>>, vector<8x8xbf16>
    tpu.vector_store %arg21[%c0_42, %c24], %147 {strides = array<i32>} : memref<8x32xbf16, #tpu.memory_space<vmem>>, vector<8x8xbf16>,
    %c0_43 = arith.constant 0 : index
    %c0_44 = arith.constant 0 : index
    %149 = vector.load %arg21[%c0_43, %c0_44] : memref<8x32xbf16, #tpu.memory_space<vmem>>, vector<8x32xbf16>
    %c0_45 = arith.constant 0 : index
    %c0_46 = arith.constant 0 : index
    %150 = vector.load %arg18[%c0_45, %c0_46] : memref<32x32xbf16, #tpu.memory_space<vmem>>, vector<32x32xbf16>
    %cst_47 = arith.constant dense<0.000000e+00> : vector<8x32xf32>
    %151 = tpu.matmul %149, %150, %cst_47 {dimension_numbers = #tpu.dot_dimension_numbers<[1], [0], [0], [1], [0, 0, 1, 1], [], []>} : vector<8x32xbf16>, vector<32x32xbf16>, vector<8x32xf32> -> vector<8x32xf32>
    %c0_48 = arith.constant 0 : index
    %c0_49 = arith.constant 0 : index
    %152 = vector.load %arg7[%c0_48, %c0_49] : memref<1x32xf32, #tpu.memory_space<vmem>>, vector<1x32xf32>
    %153 = vector.broadcast %152 : vector<1x32xf32> to vector<8x32xf32>
    %154 = arith.addf %151, %153 : vector<8x32xf32>
    %155 = arith.addf %4, %154 : vector<8x32xf32>
    %c0_50 = arith.constant 0 : index
    %c0_51 = arith.constant 0 : index
    %156 = vector.load %arg8[%c0_50, %c0_51] : memref<1x32xf32, #tpu.memory_space<vmem>>, vector<1x32xf32>
    %c0_52 = arith.constant 0 : index
    %c0_53 = arith.constant 0 : index
    %157 = vector.load %arg9[%c0_52, %c0_53] : memref<1x32xf32, #tpu.memory_space<vmem>>, vector<1x32xf32>
    %cst_54 = arith.constant dense<0.000000e+00> : vector<8xf32>
    %158 = vector.multi_reduction <add>, %155, %cst_54 [1] : vector<8x32xf32> to vector<8xf32>
    %159 = vector.shape_cast %158 : vector<8xf32> to vector<8x1xf32>
    %cst_55 = arith.constant 3.200000e+01 : f32
    %160 = vector.broadcast %cst_55 : f32 to vector<8x1xf32>
    %161 = arith.divf %159, %160 : vector<8x1xf32>
    %162 = vector.broadcast %161 : vector<8x1xf32> to vector<8x32xf32>
    %163 = arith.subf %155, %162 : vector<8x32xf32>
    %164 = arith.mulf %163, %163 : vector<8x32xf32>
    %cst_56 = arith.constant dense<0.000000e+00> : vector<8xf32>
    %165 = vector.multi_reduction <add>, %164, %cst_56 [1] : vector<8x32xf32> to vector<8xf32>
    %166 = vector.shape_cast %165 : vector<8xf32> to vector<8x1xf32>
    %cst_57 = arith.constant 3.200000e+01 : f32
    %167 = vector.broadcast %cst_57 : f32 to vector<8x1xf32>
    %168 = arith.divf %166, %167 : vector<8x1xf32>
    %169 = vector.broadcast %161 : vector<8x1xf32> to vector<8x32xf32>
    %170 = arith.subf %155, %169 : vector<8x32xf32>
    %cst_58 = arith.constant 9.99999974E-6 : f32
    %171 = vector.broadcast %cst_58 : f32 to vector<8x1xf32>
    %172 = arith.addf %168, %171 : vector<8x1xf32>
    %173 = math.rsqrt %172 : vector<8x1xf32>
    %174 = vector.broadcast %173 : vector<8x1xf32> to vector<8x32xf32>
    %175 = arith.mulf %170, %174 : vector<8x32xf32>
    %176 = vector.broadcast %156 : vector<1x32xf32> to vector<8x32xf32>
    %177 = arith.mulf %175, %176 : vector<8x32xf32>
    %178 = vector.broadcast %157 : vector<1x32xf32> to vector<8x32xf32>
    %179 = arith.addf %177, %178 : vector<8x32xf32>
    %180 = arith.truncf %179 : vector<8x32xf32> to vector<8x32xbf16>
    %cst_59 = arith.constant 0.000000e+00 : f32
    %181 = vector.broadcast %cst_59 : f32 to vector<8x32xf32>
    %c0_60 = arith.constant 0 : index
    %c0_61 = arith.constant 0 : index
    %182 = vector.load %arg19[%c0_60, %c0_61] : memref<32x128xbf16, #tpu.memory_space<vmem>>, vector<32x128xbf16>
    %cst_62 = arith.constant dense<0.000000e+00> : vector<8x128xf32>
    %183 = tpu.matmul %180, %182, %cst_62 {dimension_numbers = #tpu.dot_dimension_numbers<[1], [0], [0], [1], [0, 0, 1, 1], [], []>} : vector<8x32xbf16>, vector<32x128xbf16>, vector<8x128xf32> -> vector<8x128xf32>
    %c0_63 = arith.constant 0 : index
    %c0_64 = arith.constant 0 : index
    %184 = vector.load %arg10[%c0_63, %c0_64] : memref<1x128xf32, #tpu.memory_space<vmem>>, vector<1x128xf32>
    %185 = vector.broadcast %184 : vector<1x128xf32> to vector<8x128xf32>
    %186 = arith.addf %183, %185 : vector<8x128xf32>
    %cst_65 = arith.constant 1.702000e+00 : f32
    %187 = vector.broadcast %cst_65 : f32 to vector<8x128xf32>
    %188 = arith.mulf %187, %186 : vector<8x128xf32>
    %189 = arith.negf %188 : vector<8x128xf32>
    %190 = math.exp %189 : vector<8x128xf32>
    %cst_66 = arith.constant 1.000000e+00 : f32
    %191 = vector.broadcast %cst_66 : f32 to vector<8x128xf32>
    %192 = arith.addf %191, %190 : vector<8x128xf32>
    %193 = arith.divf %191, %192 : vector<8x128xf32>
    %194 = arith.mulf %186, %193 : vector<8x128xf32>
    %195 = arith.truncf %194 : vector<8x128xf32> to vector<8x128xbf16>
    %c0_67 = arith.constant 0 : index
    %c0_68 = arith.constant 0 : index
    %196 = vector.load %arg20[%c0_67, %c0_68] : memref<128x32xbf16, #tpu.memory_space<vmem>>, vector<128x32xbf16>
    %cst_69 = arith.constant dense<0.000000e+00> : vector<8x32xf32>
    %197 = tpu.matmul %195, %196, %cst_69 {dimension_numbers = #tpu.dot_dimension_numbers<[1], [0], [0], [1], [0, 0, 1, 1], [], []>} : vector<8x128xbf16>, vector<128x32xbf16>, vector<8x32xf32> -> vector<8x32xf32>
    %198 = arith.addf %181, %197 : vector<8x32xf32>
    %c0_70 = arith.constant 0 : index
    %c0_71 = arith.constant 0 : index
    %199 = vector.load %arg11[%c0_70, %c0_71] : memref<1x32xf32, #tpu.memory_space<vmem>>, vector<1x32xf32>
    %200 = vector.broadcast %199 : vector<1x32xf32> to vector<8x32xf32>
    %201 = arith.addf %198, %200 : vector<8x32xf32>
    %202 = arith.addf %155, %201 : vector<8x32xf32>
    %203 = vector.shape_cast %202 : vector<8x32xf32> to vector<1x8x32xf32>
    %c0_72 = arith.constant 0 : index
    %c0_73 = arith.constant 0 : index
    %c0_74 = arith.constant 0 : index
    %204 = vector.load %arg16[%c0_72, %c0_73, %c0_74] : memref<1x8x32xf32, #tpu.memory_space<vmem>>, vector<1x8x32xf32>
    tpu.vector_store %arg16[%c0_72, %c0_73, %c0_74], %203 {strides = array<i32>} : memref<1x8x32xf32, #tpu.memory_space<vmem>>, vector<1x8x32xf32>,
    return
  }
  func.func @transform_0(%arg0: i32, %arg1: i32) -> (i32, i32, i32) {
    %c1_i32 = arith.constant 1 : i32
    %0 = arith.muli %arg0, %c1_i32 : i32
    %1 = arith.addi %0, %arg1 : i32
    %c0_i32 = arith.constant 0 : i32
    %c0_i32_0 = arith.constant 0 : i32
    %c0_i32_1 = arith.constant 0 : i32
    return %1, %c0_i32, %c0_i32_0 : i32, i32, i32
  }
  func.func @transform_1(%arg0: i32, %arg1: i32) -> (i32, i32, i32) {
    %c1_i32 = arith.constant 1 : i32
    %0 = arith.muli %arg0, %c1_i32 : i32
    %1 = arith.addi %0, %arg1 : i32
    %c0_i32 = arith.constant 0 : i32
    %c0_i32_0 = arith.constant 0 : i32
    %c0_i32_1 = arith.constant 0 : i32
    return %1, %c0_i32, %c0_i32_0 : i32, i32, i32
  }
  func.func @transform_2(%arg0: i32, %arg1: i32) -> (i32, i32) {
    %c0_i32 = arith.constant 0 : i32
    %c0_i32_0 = arith.constant 0 : i32
    %c0_i32_1 = arith.constant 0 : i32
    return %c0_i32, %c0_i32_0 : i32, i32
  }
  func.func @transform_3(%arg0: i32, %arg1: i32) -> (i32, i32) {
    %c0_i32 = arith.constant 0 : i32
    %c0_i32_0 = arith.constant 0 : i32
    %c0_i32_1 = arith.constant 0 : i32
    return %c0_i32, %c0_i32_0 : i32, i32
  }
  func.func @transform_4(%arg0: i32, %arg1: i32) -> (i32, i32) {
    %c0_i32 = arith.constant 0 : i32
    %c0_i32_0 = arith.constant 0 : i32
    %c0_i32_1 = arith.constant 0 : i32
    return %c0_i32, %c0_i32_0 : i32, i32
  }
  func.func @transform_5(%arg0: i32, %arg1: i32) -> (i32, i32) {
    %c0_i32 = arith.constant 0 : i32
    %c0_i32_0 = arith.constant 0 : i32
    %c0_i32_1 = arith.constant 0 : i32
    return %c0_i32, %c0_i32_0 : i32, i32
  }
  func.func @transform_6(%arg0: i32, %arg1: i32) -> (i32, i32) {
    %c0_i32 = arith.constant 0 : i32
    %c0_i32_0 = arith.constant 0 : i32
    %c0_i32_1 = arith.constant 0 : i32
    return %c0_i32, %c0_i32_0 : i32, i32
  }
  func.func @transform_7(%arg0: i32, %arg1: i32) -> (i32, i32) {
    %c0_i32 = arith.constant 0 : i32
    %c0_i32_0 = arith.constant 0 : i32
    %c0_i32_1 = arith.constant 0 : i32
    return %c0_i32, %c0_i32_0 : i32, i32
  }
  func.func @transform_8(%arg0: i32, %arg1: i32) -> (i32, i32) {
    %c0_i32 = arith.constant 0 : i32
    %c0_i32_0 = arith.constant 0 : i32
    %c0_i32_1 = arith.constant 0 : i32
    return %c0_i32, %c0_i32_0 : i32, i32
  }
  func.func @transform_9(%arg0: i32, %arg1: i32) -> (i32, i32) {
    %c0_i32 = arith.constant 0 : i32
    %c0_i32_0 = arith.constant 0 : i32
    %c0_i32_1 = arith.constant 0 : i32
    return %c0_i32, %c0_i32_0 : i32, i32
  }
  func.func @transform_14(%arg0: i32, %arg1: i32) -> (i32, i32, i32) {
    %c1_i32 = arith.constant 1 : i32
    %0 = arith.muli %arg0, %c1_i32 : i32
    %1 = arith.addi %0, %arg1 : i32
    %c0_i32 = arith.constant 0 : i32
    %c0_i32_0 = arith.constant 0 : i32
    %c0_i32_1 = arith.constant 0 : i32
    return %1, %c0_i32, %c0_i32_0 : i32, i32, i32
  }
}

</mosaic_0001>

<llo_original>
// kernel: tpu_custom_call.1
$region0: #{tpu_custom_call.1}
  #allocation0 [shape = 'u32[]', space=smem, size = 0x4, offset = 0x4, fixed_abs, tag = 'smem constant byte address 0x4 - core index']
  #allocation1 [shape = 'u32[72,128]{1,0:T(1,128)}', space=vmem, size = 0x9000, scoped, tag = 'internal scratch']
  #allocation2 [shape = 'bf16[32,96]{1,0:T(8,128)(2,1)}', space=vmem, size = 0x2000, scoped, tag = 'scratch operand']
  #allocation3 [shape = 'bf16[32,32]{1,0:T(8,128)(2,1)}', space=vmem, size = 0x2000, scoped, tag = 'scratch operand']
  #allocation4 [shape = 'bf16[32,128]{1,0:T(8,128)(2,1)}', space=vmem, size = 0x2000, scoped, tag = 'scratch operand']
  #allocation5 [shape = 'bf16[128,32]{1,0:T(8,128)(2,1)}', space=vmem, size = 0x8000, scoped, tag = 'scratch operand']
  #allocation6 [shape = 'bf16[8,32]{1,0:T(8,128)(2,1)}', space=vmem, size = 0x800, scoped, tag = 'scratch operand']
  #allocation10 [shape = 's32[]', space=sflag, size = 0x4, offset = 0, fixed_abs, tag = 'sflag constant byte address 0x0 - dummy sync flag']
  #allocation12 [shape = 's32[]', space=sflag, size = 0x4, offset = 0, fixed_abs, tag = 'sflag constant byte address 0x0 - dummy sync flag']
  #allocation14 [shape = 's32[]', space=sflag, size = 0x4, offset = 0, fixed_abs, tag = 'sflag constant byte address 0x0 - dummy sync flag']
  #allocation16 [shape = 's32[]', space=sflag, size = 0x4, offset = 0, fixed_abs, tag = 'sflag constant byte address 0x0 - dummy sync flag']
  %s0 = inlined_call_operand.vmem [shape: f32[2,8,32], index: 0, kind: input, shape index: {}]
  %s1 = inlined_call_operand.vmem [shape: s32[2,1,8], index: 1, kind: input, shape index: {}]
  %s2 = inlined_call_operand.vmem [shape: f32[1,32], index: 2, kind: input, shape index: {}]
  %s3 = inlined_call_operand.vmem [shape: f32[1,32], index: 3, kind: input, shape index: {}]
  %s4 = inlined_call_operand.vmem [shape: f32[1,96], index: 4, kind: input, shape index: {}]
  %s5 = inlined_call_operand.vmem [shape: f32[1,32], index: 5, kind: input, shape index: {}]
  %s6 = inlined_call_operand.vmem [shape: f32[1,32], index: 6, kind: input, shape index: {}]
  %s7 = inlined_call_operand.vmem [shape: f32[1,32], index: 7, kind: input, shape index: {}]
  %s8 = inlined_call_operand.vmem [shape: f32[1,128], index: 8, kind: input, shape index: {}]
  %s9 = inlined_call_operand.vmem [shape: f32[1,32], index: 9, kind: input, shape index: {}]
  %s10 = inlined_call_operand.vmem [shape: bf16[32,96], index: 10, kind: input, shape index: {}]
  %s11 = inlined_call_operand.vmem [shape: bf16[32,32], index: 11, kind: input, shape index: {}]
  %s12 = inlined_call_operand.vmem [shape: bf16[32,128], index: 12, kind: input, shape index: {}]
  %s13 = inlined_call_operand.vmem [shape: bf16[128,32], index: 13, kind: input, shape index: {}]
  %s14 = inlined_call_operand.hbm [shape: f32[2,8,32], index: 14, kind: output, shape index: {}]
  %s15 = sld [smem:[#allocation0]]
  $region157: #{tpu_custom_call.1} parent=0
    _
  %s17 = ssub.s32 1, %s15
  %s18 = scalar_select 0, %s17, %s15
  $region1: #{tpu_custom_call.1} parent=0
    #allocation7 [shape = 'u8[8192]{0}', space=vmem, size = 0x2000, scoped, tag = 'output window, operand 0']
    #allocation8 [shape = 's32[2]{0}', space=sflag, size = 0x8, scoped, tag = 'scoped memory for tpu_custom_call.1']
    %19 = vsyncpa [#allocation8], 0
    %s20 = scalar_lea.sflag [#allocation8], 1
    %21 = vsyncpa %s20, 0
    loop: start=0, step=1, limit=4
    $region2: #{tpu_custom_call.1} parent=1 // loop_pre_header
      _
    $region3: #{tpu_custom_call.1} parent=1 // loop_header
      %s23 = sphi 0, %s27
      %p24 = scmp.ge.s32.totalorder %s23, 4
      %s30 = sphi 0, %s42
      %s31 = sphi 0, %s38
      %s32 = sphi 0, %s30
      %s33 = sphi 0, %s31
      %s34 = sphi 0, %s32
      %s35 = sphi 0, %s33
      %s47 = sphi 0, %s49
      %s50 = sphi 0, %s47
      %s51 = sphi 0, %s50
      %s67 = sphi 0, %s51
      %s75 = sphi 0, %s77
      %s78 = sphi 0, %s75
      %s79 = sphi 0, %s78
      %s95 = sphi 0, %s79
      %s99 = sphi 0, %s99
      %s101 = sphi 0, %s99
      %s102 = sphi 0, %s101
      %s116 = sphi 0, %s102
      %s120 = sphi 0, %s120
      %s122 = sphi 0, %s120
      %s123 = sphi 0, %s122
      %s137 = sphi 0, %s123
      %s141 = sphi 0, %s141
      %s143 = sphi 0, %s141
      %s144 = sphi 0, %s143
      %s158 = sphi 0, %s144
      %s162 = sphi 0, %s162
      %s164 = sphi 0, %s162
      %s165 = sphi 0, %s164
      %s179 = sphi 0, %s165
      %s183 = sphi 0, %s183
      %s185 = sphi 0, %s183
      %s186 = sphi 0, %s185
      %s200 = sphi 0, %s186
      %s204 = sphi 0, %s204
      %s206 = sphi 0, %s204
      %s207 = sphi 0, %s206
      %s221 = sphi 0, %s207
      %s225 = sphi 0, %s225
      %s227 = sphi 0, %s225
      %s228 = sphi 0, %s227
      %s242 = sphi 0, %s228
      %s246 = sphi 0, %s246
      %s248 = sphi 0, %s246
      %s249 = sphi 0, %s248
      %s263 = sphi 0, %s249
      %s271 = sphi 0, %s273
      %s274 = sphi 0, %s271
      %s275 = sphi 0, %s274
      %s291 = sphi 0, %s275
    $region4: #{tpu_custom_call.1} parent=1 // loop_header_branch
      %26 = sbr.rel (%p24) target = $region8
    $region5: #{tpu_custom_call.1} parent=1 // loop_body
      %s28 = ssub.s32 %s23, 1
      %s29 = ssub.s32 %s23, 2
      %s36 = sadd.s32 1, %s31
      %p37 = scmp.ge.s32.totalorder %s36, 1
      %s38 = scalar_select %p37, 0, %s36
      %s39 = sadd.s32 1, %s30
      %s40 = scalar_select %p37, %s39, %s30
      %p41 = scmp.ge.s32.totalorder %s40, 2
      %s42 = scalar_select %p41, 0, %s40
      %s43 = sadd.s32 %s30, %s31
      %s44 = sadd.s32 %s42, %s38
      %s45 = ssub.s32 %s43, %s44
      %p46 = scmp.eq.s32.totalorder %s45, 0
      %s48 = sadd.s32 %s47, 1
      %s49 = scalar_select %p46, %s47, %s48
      %p52 = pneg %p46
      %p53 = scmp.eq.s32.totalorder %s23, 1
      %p54 = por %p52, %p53
      %p55 = scmp.ne.s32.totalorder %s47, %s50
      %p56 = scmp.eq.s32.totalorder %s23, 0
      %p57 = por %p55, %p56
      %p58 = scmp.ne.s32.totalorder %s47, %s50
      %p59 = scmp.eq.s32.totalorder %s28, 1
      %p60 = por %p58, %p59
      %p61 = scmp.ne.s32.totalorder %s50, %s51
      %p62 = scmp.eq.s32.totalorder %s28, 0
      %p63 = por %p61, %p62
      %p64 = scmp.ne.s32.totalorder %s50, %s51
      %p65 = scmp.eq.s32.totalorder %s29, 1
      %p66 = por %p64, %p65
      %p68 = scmp.ne.s32.totalorder %s51, %s67
      %p69 = scmp.eq.s32.totalorder %s29, 0
      %p70 = por %p68, %p69
      %s71 = sadd.s32 %s30, %s31
      %s72 = sadd.s32 %s42, %s38
      %s73 = ssub.s32 %s71, %s72
      %p74 = scmp.eq.s32.totalorder %s73, 0
      %s76 = sadd.s32 %s75, 1
      %s77 = scalar_select %p74, %s75, %s76
      %p80 = pneg %p74
      %p81 = scmp.eq.s32.totalorder %s23, 1
      %p82 = por %p80, %p81
      %p83 = scmp.ne.s32.totalorder %s75, %s78
      %p84 = scmp.eq.s32.totalorder %s23, 0
      %p85 = por %p83, %p84
      %p86 = scmp.ne.s32.totalorder %s75, %s78
      %p87 = scmp.eq.s32.totalorder %s28, 1
      %p88 = por %p86, %p87
      %p89 = scmp.ne.s32.totalorder %s78, %s79
      %p90 = scmp.eq.s32.totalorder %s28, 0
      %p91 = por %p89, %p90
      %p92 = scmp.ne.s32.totalorder %s78, %s79
      %p93 = scmp.eq.s32.totalorder %s29, 1
      %p94 = por %p92, %p93
      %p96 = scmp.ne.s32.totalorder %s79, %s95
      %p97 = scmp.eq.s32.totalorder %s29, 0
      %p98 = por %p96, %p97
      %s100 = sadd.s32 %s99, 1
      %p103 = scmp.eq.s32.totalorder %s23, 1
      %p104 = scmp.ne.s32.totalorder %s99, %s101
      %p105 = scmp.eq.s32.totalorder %s23, 0
      %p106 = por %p104, %p105
      %p107 = scmp.ne.s32.totalorder %s99, %s101
      %p108 = scmp.eq.s32.totalorder %s28, 1
      %p109 = por %p107, %p108
      %p110 = scmp.ne.s32.totalorder %s101, %s102
      %p111 = scmp.eq.s32.totalorder %s28, 0
      %p112 = por %p110, %p111
      %p113 = scmp.ne.s32.totalorder %s101, %s102
      %p114 = scmp.eq.s32.totalorder %s29, 1
      %p115 = por %p113, %p114
      %p117 = scmp.ne.s32.totalorder %s102, %s116
      %p118 = scmp.eq.s32.totalorder %s29, 0
      %p119 = por %p117, %p118
      %s121 = sadd.s32 %s120, 1
      %p124 = scmp.eq.s32.totalorder %s23, 1
      %p125 = scmp.ne.s32.totalorder %s120, %s122
      %p126 = scmp.eq.s32.totalorder %s23, 0
      %p127 = por %p125, %p126
      %p128 = scmp.ne.s32.totalorder %s120, %s122
      %p129 = scmp.eq.s32.totalorder %s28, 1
      %p130 = por %p128, %p129
      %p131 = scmp.ne.s32.totalorder %s122, %s123
      %p132 = scmp.eq.s32.totalorder %s28, 0
      %p133 = por %p131, %p132
      %p134 = scmp.ne.s32.totalorder %s122, %s123
      %p135 = scmp.eq.s32.totalorder %s29, 1
      %p136 = por %p134, %p135
      %p138 = scmp.ne.s32.totalorder %s123, %s137
      %p139 = scmp.eq.s32.totalorder %s29, 0
      %p140 = por %p138, %p139
      %s142 = sadd.s32 %s141, 1
      %p145 = scmp.eq.s32.totalorder %s23, 1
      %p146 = scmp.ne.s32.totalorder %s141, %s143
      %p147 = scmp.eq.s32.totalorder %s23, 0
      %p148 = por %p146, %p147
      %p149 = scmp.ne.s32.totalorder %s141, %s143
      %p150 = scmp.eq.s32.totalorder %s28, 1
      %p151 = por %p149, %p150
      %p152 = scmp.ne.s32.totalorder %s143, %s144
      %p153 = scmp.eq.s32.totalorder %s28, 0
      %p154 = por %p152, %p153
      %p155 = scmp.ne.s32.totalorder %s143, %s144
      %p156 = scmp.eq.s32.totalorder %s29, 1
      %p157 = por %p155, %p156
      %p159 = scmp.ne.s32.totalorder %s144, %s158
      %p160 = scmp.eq.s32.totalorder %s29, 0
      %p161 = por %p159, %p160
      %s163 = sadd.s32 %s162, 1
      %p166 = scmp.eq.s32.totalorder %s23, 1
      %p167 = scmp.ne.s32.totalorder %s162, %s164
      %p168 = scmp.eq.s32.totalorder %s23, 0
      %p169 = por %p167, %p168
      %p170 = scmp.ne.s32.totalorder %s162, %s164
      %p171 = scmp.eq.s32.totalorder %s28, 1
      %p172 = por %p170, %p171
      %p173 = scmp.ne.s32.totalorder %s164, %s165
      %p174 = scmp.eq.s32.totalorder %s28, 0
      %p175 = por %p173, %p174
      %p176 = scmp.ne.s32.totalorder %s164, %s165
      %p177 = scmp.eq.s32.totalorder %s29, 1
      %p178 = por %p176, %p177
      %p180 = scmp.ne.s32.totalorder %s165, %s179
      %p181 = scmp.eq.s32.totalorder %s29, 0
      %p182 = por %p180, %p181
      %s184 = sadd.s32 %s183, 1
      %p187 = scmp.eq.s32.totalorder %s23, 1
      %p188 = scmp.ne.s32.totalorder %s183, %s185
      %p189 = scmp.eq.s32.totalorder %s23, 0
      %p190 = por %p188, %p189
      %p191 = scmp.ne.s32.totalorder %s183, %s185
      %p192 = scmp.eq.s32.totalorder %s28, 1
      %p193 = por %p191, %p192
      %p194 = scmp.ne.s32.totalorder %s185, %s186
      %p195 = scmp.eq.s32.totalorder %s28, 0
      %p196 = por %p194, %p195
      %p197 = scmp.ne.s32.totalorder %s185, %s186
      %p198 = scmp.eq.s32.totalorder %s29, 1
      %p199 = por %p197, %p198
      %p201 = scmp.ne.s32.totalorder %s186, %s200
      %p202 = scmp.eq.s32.totalorder %s29, 0
      %p203 = por %p201, %p202
      %s205 = sadd.s32 %s204, 1
      %p208 = scmp.eq.s32.totalorder %s23, 1
      %p209 = scmp.ne.s32.totalorder %s204, %s206
      %p210 = scmp.eq.s32.totalorder %s23, 0
      %p211 = por %p209, %p210
      %p212 = scmp.ne.s32.totalorder %s204, %s206
      %p213 = scmp.eq.s32.totalorder %s28, 1
      %p214 = por %p212, %p213
      %p215 = scmp.ne.s32.totalorder %s206, %s207
      %p216 = scmp.eq.s32.totalorder %s28, 0
      %p217 = por %p215, %p216
      %p218 = scmp.ne.s32.totalorder %s206, %s207
      %p219 = scmp.eq.s32.totalorder %s29, 1
      %p220 = por %p218, %p219
      %p222 = scmp.ne.s32.totalorder %s207, %s221
      %p223 = scmp.eq.s32.totalorder %s29, 0
      %p224 = por %p222, %p223
      %s226 = sadd.s32 %s225, 1
      %p229 = scmp.eq.s32.totalorder %s23, 1
      %p230 = scmp.ne.s32.totalorder %s225, %s227
      %p231 = scmp.eq.s32.totalorder %s23, 0
      %p232 = por %p230, %p231
      %p233 = scmp.ne.s32.totalorder %s225, %s227
      %p234 = scmp.eq.s32.totalorder %s28, 1
      %p235 = por %p233, %p234
      %p236 = scmp.ne.s32.totalorder %s227, %s228
      %p237 = scmp.eq.s32.totalorder %s28, 0
      %p238 = por %p236, %p237
      %p239 = scmp.ne.s32.totalorder %s227, %s228
      %p240 = scmp.eq.s32.totalorder %s29, 1
      %p241 = por %p239, %p240
      %p243 = scmp.ne.s32.totalorder %s228, %s242
      %p244 = scmp.eq.s32.totalorder %s29, 0
      %p245 = por %p243, %p244
      %s247 = sadd.s32 %s246, 1
      %p250 = scmp.eq.s32.totalorder %s23, 1
      %p251 = scmp.ne.s32.totalorder %s246, %s248
      %p252 = scmp.eq.s32.totalorder %s23, 0
      %p253 = por %p251, %p252
      %p254 = scmp.ne.s32.totalorder %s246, %s248
      %p255 = scmp.eq.s32.totalorder %s28, 1
      %p256 = por %p254, %p255
      %p257 = scmp.ne.s32.totalorder %s248, %s249
      %p258 = scmp.eq.s32.totalorder %s28, 0
      %p259 = por %p257, %p258
      %p260 = scmp.ne.s32.totalorder %s248, %s249
      %p261 = scmp.eq.s32.totalorder %s29, 1
      %p262 = por %p260, %p261
      %p264 = scmp.ne.s32.totalorder %s249, %s263
      %p265 = scmp.eq.s32.totalorder %s29, 0
      %p266 = por %p264, %p265
      %s267 = sadd.s32 %s30, %s31
      %s268 = sadd.s32 %s42, %s38
      %s269 = ssub.s32 %s267, %s268
      %p270 = scmp.eq.s32.totalorder %s269, 0
      %s272 = sadd.s32 %s271, 1
      %s273 = scalar_select %p270, %s271, %s272
      %p276 = pneg %p270
      %p277 = scmp.eq.s32.totalorder %s23, 1
      %p278 = por %p276, %p277
      %p279 = scmp.ne.s32.totalorder %s271, %s274
      %p280 = scmp.eq.s32.totalorder %s23, 0
      %p281 = por %p279, %p280
      %p282 = scmp.ne.s32.totalorder %s271, %s274
      %p283 = scmp.eq.s32.totalorder %s28, 1
      %p284 = por %p282, %p283
      %p285 = scmp.ne.s32.totalorder %s274, %s275
      %p286 = scmp.eq.s32.totalorder %s28, 0
      %p287 = por %p285, %p286
      %p288 = scmp.ne.s32.totalorder %s274, %s275
      %p289 = scmp.eq.s32.totalorder %s29, 1
      %p290 = por %p288, %p289
      %p292 = scmp.ne.s32.totalorder %s275, %s291
      %p293 = scmp.eq.s32.totalorder %s29, 0
      %p294 = por %p292, %p293
      %p295 = scmp.le.s32.totalorder 1, %s23
      %p296 = scmp.lt.s32.totalorder %s23, 3
      %p297 = pnand %p295, %p296
      %p298 = pneg %p297
      // Predicated region
      $region9: #{tpu_custom_call.1} parent=5 // pred_check
        _
      $region10: #{tpu_custom_call.1} parent=5 // pred_check_branch
        %300 = sbr.rel (%p297) target = $region12
      $region11: #{tpu_custom_call.1} parent=5 // pred_region
        %s301 = ssub.s32 %s23, 1
        // Predicated region
        $region13: #{tpu_custom_call.1} parent=11 // pred_check
          %p302 = pneg %p112
        $region14: #{tpu_custom_call.1} parent=11 // pred_check_branch
          %304 = sbr.rel (%p302) target = $region16
        $region15: #{tpu_custom_call.1} parent=11 // pred_region
          _
        $region16: #{tpu_custom_call.1} parent=11 // pred_fallthru
          _
        // Predicated region
        $region17: #{tpu_custom_call.1} parent=11 // pred_check
          %p305 = pneg %p133
        $region18: #{tpu_custom_call.1} parent=11 // pred_check_branch
          %307 = sbr.rel (%p305) target = $region20
        $region19: #{tpu_custom_call.1} parent=11 // pred_region
          _
        $region20: #{tpu_custom_call.1} parent=11 // pred_fallthru
          _
        // Predicated region
        $region21: #{tpu_custom_call.1} parent=11 // pred_check
          %p308 = pneg %p154
        $region22: #{tpu_custom_call.1} parent=11 // pred_check_branch
          %310 = sbr.rel (%p308) target = $region24
        $region23: #{tpu_custom_call.1} parent=11 // pred_region
          _
        $region24: #{tpu_custom_call.1} parent=11 // pred_fallthru
          _
        // Predicated region
        $region25: #{tpu_custom_call.1} parent=11 // pred_check
          %p311 = pneg %p175
        $region26: #{tpu_custom_call.1} parent=11 // pred_check_branch
          %313 = sbr.rel (%p311) target = $region28
        $region27: #{tpu_custom_call.1} parent=11 // pred_region
          _
        $region28: #{tpu_custom_call.1} parent=11 // pred_fallthru
          _
        // Predicated region
        $region29: #{tpu_custom_call.1} parent=11 // pred_check
          %p314 = pneg %p196
        $region30: #{tpu_custom_call.1} parent=11 // pred_check_branch
          %316 = sbr.rel (%p314) target = $region32
        $region31: #{tpu_custom_call.1} parent=11 // pred_region
          _
        $region32: #{tpu_custom_call.1} parent=11 // pred_fallthru
          _
        // Predicated region
        $region33: #{tpu_custom_call.1} parent=11 // pred_check
          %p317 = pneg %p217
        $region34: #{tpu_custom_call.1} parent=11 // pred_check_branch
          %319 = sbr.rel (%p317) target = $region36
        $region35: #{tpu_custom_call.1} parent=11 // pred_region
          _
        $region36: #{tpu_custom_call.1} parent=11 // pred_fallthru
          _
        // Predicated region
        $region37: #{tpu_custom_call.1} parent=11 // pred_check
          %p320 = pneg %p238
        $region38: #{tpu_custom_call.1} parent=11 // pred_check_branch
          %322 = sbr.rel (%p320) target = $region40
        $region39: #{tpu_custom_call.1} parent=11 // pred_region
          _
        $region40: #{tpu_custom_call.1} parent=11 // pred_fallthru
          _
        // Predicated region
        $region41: #{tpu_custom_call.1} parent=11 // pred_check
          %p323 = pneg %p259
        $region42: #{tpu_custom_call.1} parent=11 // pred_check_branch
          %325 = sbr.rel (%p323) target = $region44
        $region43: #{tpu_custom_call.1} parent=11 // pred_region
          _
        $region44: #{tpu_custom_call.1} parent=11 // pred_fallthru
          _
      $region12: #{tpu_custom_call.1} parent=5 // pred_fallthru
        _
      %p326 = scmp.lt.s32.totalorder %s23, 2
      // Predicated region
      $region45: #{tpu_custom_call.1} parent=5 // pred_check
        %p327 = pneg %p326
      $region46: #{tpu_custom_call.1} parent=5 // pred_check_branch
        %329 = sbr.rel (%p327) target = $region48
      $region47: #{tpu_custom_call.1} parent=5 // pred_region
        // Predicated region
        $region49: #{tpu_custom_call.1} parent=47 // pred_check
          %p330 = pneg %p57
        $region50: #{tpu_custom_call.1} parent=47 // pred_check_branch
          %332 = sbr.rel (%p330) target = $region52
        $region51: #{tpu_custom_call.1} parent=47 // pred_region
          %s333 = sadd.s32 %s30, %s31
          %p334 = scmp.lt.s32.totalorder %s333, 1
          %s335 = scalar_select %p334, %s333, 1
          %s336 = smul.addr %s335, 8
          %s337 = scalar_lea.vmem %s0, %s336
          %s338 = sadd.s32 %s30, %s31
        $region52: #{tpu_custom_call.1} parent=47 // pred_fallthru
          _
        // Predicated region
        $region53: #{tpu_custom_call.1} parent=47 // pred_check
          %p339 = pneg %p85
        $region54: #{tpu_custom_call.1} parent=47 // pred_check_branch
          %341 = sbr.rel (%p339) target = $region56
        $region55: #{tpu_custom_call.1} parent=47 // pred_region
          %s342 = sadd.s32 %s30, %s31
          %p343 = scmp.lt.s32.totalorder %s342, 1
          %s344 = scalar_select %p343, %s342, 1
          %s345 = scalar_lea.vmem %s1, %s344
          %s346 = sadd.s32 %s30, %s31
        $region56: #{tpu_custom_call.1} parent=47 // pred_fallthru
          _
      $region48: #{tpu_custom_call.1} parent=5 // pred_fallthru
        _
      %p347 = scmp.le.s32.totalorder 1, %s23
      %p348 = scmp.lt.s32.totalorder %s23, 3
      %p349 = pnand %p347, %p348
      %p350 = pneg %p349
      // Predicated region
      $region57: #{tpu_custom_call.1} parent=5 // pred_check
        _
      $region58: #{tpu_custom_call.1} parent=5 // pred_check_branch
        %352 = sbr.rel (%p349) target = $region60
      $region59: #{tpu_custom_call.1} parent=5 // pred_region
        %s353 = ssub.s32 %s23, 1
        %s354 = sadd.s32 %s32, %s33
        %p355 = scmp.lt.s32.totalorder %s354, 1
        %s356 = scalar_select %p355, %s354, 1
        %s357 = smul.addr %s356, 8
        %s358 = scalar_lea.vmem %s0, %s357
        %p359 = pneg %p63
        %p360 = pneg %p60
        %s361 = sadd.s32 %s32, %s33
        %p362 = scmp.lt.s32.totalorder %s361, 1
        %s363 = scalar_select %p362, %s361, 1
        %s364 = scalar_lea.vmem %s1, %s363
        %p365 = pneg %p91
        %p366 = pneg %p88
        %p367 = pneg %p112
        %p368 = pneg %p109
        %p369 = pneg %p133
        %p370 = pneg %p130
        %p371 = pneg %p154
        %p372 = pneg %p151
        %p373 = pneg %p175
        %p374 = pneg %p172
        %p375 = pneg %p196
        %p376 = pneg %p193
        %p377 = pneg %p217
        %p378 = pneg %p214
        %p379 = pneg %p238
        %p380 = pneg %p235
        %p381 = pneg %p259
        %p382 = pneg %p256
        %p383 = pneg %p287
        %p384 = pneg %p284
        %s385 = sand.u32 %s274, 1
        %s386 = scalar_lea.sflag [#allocation8], %s385
        %s387 = sand.u32 %s274, 1
        %s388 = smul.addr %s387, 8
        %s389 = scalar_lea.vmem [#allocation7], %s388
        %s390 = sadd.s32 %s32, %s33
        %p391 = scmp.lt.s32.totalorder %s390, 1
        %s392 = scalar_select %p391, %s390, 1
        %s393 = smul.addr %s392, 8
        %s394 = scalar_lea.vmem %s0, %s393
        %s395 = sadd.s32 %s32, %s33
        %s396 = sadd.s32 %s32, %s33
        %p397 = scmp.lt.s32.totalorder %s396, 1
        %s398 = scalar_select %p397, %s396, 1
        %s399 = scalar_lea.vmem %s1, %s398
        %s400 = sadd.s32 %s32, %s33
        %s401 = sadd.s32 %s32, %s33
        %p403 = scmp.eq.s32.totalorder %s33, 0
        // Predicated region
        $region61: #{tpu_custom_call.1} parent=59 // pred_check
          %p404 = pneg %p403
        $region62: #{tpu_custom_call.1} parent=59 // pred_check_branch
          %406 = sbr.rel (%p404) target = $region64
        $region63: #{tpu_custom_call.1} parent=59 // pred_region
          $region65: #{tpu_custom_call.1} parent=63
            #allocation9 [shape = 's32[1]{0}', space=sflag, size = 0x4, scoped, tag = 'scoped memory for tpu_custom_call.1']
            // Predicated region
            $region66: #{tpu_custom_call.1} parent=65 // pred_check
              _
            $region67: #{tpu_custom_call.1} parent=65 // pred_check_branch
              %408 = sbr.rel (0) target = $region69
            $region68: #{tpu_custom_call.1} parent=65 // pred_region
              loop: start=0, step=1, limit=1
              $region70: #{tpu_custom_call.1} parent=68 // loop_pre_header
                _
              $region71: #{tpu_custom_call.1} parent=68 // loop_header
                %s410 = sphi 0, %s414
                %p411 = scmp.ge.s32.totalorder %s410, 1
                %s415 = sphi %s10, %s10
                %s416 = sphi [#allocation2], [#allocation2]
              $region72: #{tpu_custom_call.1} parent=68 // loop_header_branch
                %413 = sbr.rel (%p411) target = $region76
              $region73: #{tpu_custom_call.1} parent=68 // loop_body
                %v417 = vld [vmem:[%s415] sm:$0xff]
                %418 = vst [vmem:[%s416] sm:$0xff] %v417
                %v419 = vld [vmem:[%s415 + $0x8] sm:$0xff]
                %420 = vst [vmem:[%s416 + $0x8] sm:$0xff] %v419
              $region74: #{tpu_custom_call.1} parent=68 // loop_footer
                %s414 = sadd.s32 1, %s410
              $region75: #{tpu_custom_call.1} parent=68 // loop_footer_branch
                %409 = sbr.rel target = $region71
              $region76: #{tpu_custom_call.1} parent=68 // loop_exit
                _
            $region69: #{tpu_custom_call.1} parent=65 // pred_fallthru
              _
            // Predicated region
            $region77: #{tpu_custom_call.1} parent=65 // pred_check
              _
            $region78: #{tpu_custom_call.1} parent=65 // pred_check_branch
              %422 = sbr.rel target = $region80
            $region79: #{tpu_custom_call.1} parent=65 // pred_region
              _
            $region80: #{tpu_custom_call.1} parent=65 // pred_fallthru
              _
            // Predicated region
            $region81: #{tpu_custom_call.1} parent=65 // pred_check
              _
            $region82: #{tpu_custom_call.1} parent=65 // pred_check_branch
              %425 = sbr.rel (0) target = $region84
            $region83: #{tpu_custom_call.1} parent=65 // pred_region
              %426 = vsyncadd [#allocation9], 256
            $region84: #{tpu_custom_call.1} parent=65 // pred_fallthru
              _
            %s427 = smul.u32 4, 4
            %s428 = smul.u32 %s427, 1
            %s429 = sshll.u32 %s428, 4
            %430 = dma.done [#allocation9], %s429
          $region85: #{tpu_custom_call.1} parent=63
            #allocation11 [shape = 's32[1]{0}', space=sflag, size = 0x4, scoped, tag = 'scoped memory for tpu_custom_call.1']
            // Predicated region
            $region86: #{tpu_custom_call.1} parent=85 // pred_check
              _
            $region87: #{tpu_custom_call.1} parent=85 // pred_check_branch
              %432 = sbr.rel (0) target = $region89
            $region88: #{tpu_custom_call.1} parent=85 // pred_region
              loop: start=0, step=1, limit=1
              $region90: #{tpu_custom_call.1} parent=88 // loop_pre_header
                _
              $region91: #{tpu_custom_call.1} parent=88 // loop_header
                %s434 = sphi 0, %s438
                %p435 = scmp.ge.s32.totalorder %s434, 1
                %s439 = sphi %s11, %s11
                %s440 = sphi [#allocation3], [#allocation3]
              $region92: #{tpu_custom_call.1} parent=88 // loop_header_branch
                %437 = sbr.rel (%p435) target = $region96
              $region93: #{tpu_custom_call.1} parent=88 // loop_body
                %v441 = vld [vmem:[%s439] sm:$0xff]
                %442 = vst [vmem:[%s440] sm:$0xff] %v441
                %v443 = vld [vmem:[%s439 + $0x8] sm:$0xff]
                %444 = vst [vmem:[%s440 + $0x8] sm:$0xff] %v443
              $region94: #{tpu_custom_call.1} parent=88 // loop_footer
                %s438 = sadd.s32 1, %s434
              $region95: #{tpu_custom_call.1} parent=88 // loop_footer_branch
                %433 = sbr.rel target = $region91
              $region96: #{tpu_custom_call.1} parent=88 // loop_exit
                _
            $region89: #{tpu_custom_call.1} parent=85 // pred_fallthru
              _
            // Predicated region
            $region97: #{tpu_custom_call.1} parent=85 // pred_check
              _
            $region98: #{tpu_custom_call.1} parent=85 // pred_check_branch
              %446 = sbr.rel target = $region100
            $region99: #{tpu_custom_call.1} parent=85 // pred_region
              _
            $region100: #{tpu_custom_call.1} parent=85 // pred_fallthru
              _
            // Predicated region
            $region101: #{tpu_custom_call.1} parent=85 // pred_check
              _
            $region102: #{tpu_custom_call.1} parent=85 // pred_check_branch
              %449 = sbr.rel (0) target = $region104
            $region103: #{tpu_custom_call.1} parent=85 // pred_region
              %450 = vsyncadd [#allocation11], 256
            $region104: #{tpu_custom_call.1} parent=85 // pred_fallthru
              _
            %s451 = smul.u32 4, 4
            %s452 = smul.u32 %s451, 1
            %s453 = sshll.u32 %s452, 4
            %454 = dma.done [#allocation11], %s453
          $region105: #{tpu_custom_call.1} parent=63
            #allocation13 [shape = 's32[1]{0}', space=sflag, size = 0x4, scoped, tag = 'scoped memory for tpu_custom_call.1']
            // Predicated region
            $region106: #{tpu_custom_call.1} parent=105 // pred_check
              _
            $region107: #{tpu_custom_call.1} parent=105 // pred_check_branch
              %456 = sbr.rel (0) target = $region109
            $region108: #{tpu_custom_call.1} parent=105 // pred_region
              loop: start=0, step=1, limit=1
              $region110: #{tpu_custom_call.1} parent=108 // loop_pre_header
                _
              $region111: #{tpu_custom_call.1} parent=108 // loop_header
                %s458 = sphi 0, %s462
                %p459 = scmp.ge.s32.totalorder %s458, 1
                %s463 = sphi %s12, %s12
                %s464 = sphi [#allocation4], [#allocation4]
              $region112: #{tpu_custom_call.1} parent=108 // loop_header_branch
                %461 = sbr.rel (%p459) target = $region116
              $region113: #{tpu_custom_call.1} parent=108 // loop_body
                %v465 = vld [vmem:[%s463] sm:$0xff]
                %466 = vst [vmem:[%s464] sm:$0xff] %v465
                %v467 = vld [vmem:[%s463 + $0x8] sm:$0xff]
                %468 = vst [vmem:[%s464 + $0x8] sm:$0xff] %v467
              $region114: #{tpu_custom_call.1} parent=108 // loop_footer
                %s462 = sadd.s32 1, %s458
              $region115: #{tpu_custom_call.1} parent=108 // loop_footer_branch
                %457 = sbr.rel target = $region111
              $region116: #{tpu_custom_call.1} parent=108 // loop_exit
                _
            $region109: #{tpu_custom_call.1} parent=105 // pred_fallthru
              _
            // Predicated region
            $region117: #{tpu_custom_call.1} parent=105 // pred_check
              _
            $region118: #{tpu_custom_call.1} parent=105 // pred_check_branch
              %470 = sbr.rel target = $region120
            $region119: #{tpu_custom_call.1} parent=105 // pred_region
              _
            $region120: #{tpu_custom_call.1} parent=105 // pred_fallthru
              _
            // Predicated region
            $region121: #{tpu_custom_call.1} parent=105 // pred_check
              _
            $region122: #{tpu_custom_call.1} parent=105 // pred_check_branch
              %473 = sbr.rel (0) target = $region124
            $region123: #{tpu_custom_call.1} parent=105 // pred_region
              %474 = vsyncadd [#allocation13], 256
            $region124: #{tpu_custom_call.1} parent=105 // pred_fallthru
              _
            %s475 = smul.u32 4, 4
            %s476 = smul.u32 %s475, 1
            %s477 = sshll.u32 %s476, 4
            %478 = dma.done [#allocation13], %s477
          $region125: #{tpu_custom_call.1} parent=63
            #allocation15 [shape = 's32[1]{0}', space=sflag, size = 0x4, scoped, tag = 'scoped memory for tpu_custom_call.1']
            // Predicated region
            $region126: #{tpu_custom_call.1} parent=125 // pred_check
              _
            $region127: #{tpu_custom_call.1} parent=125 // pred_check_branch
              %480 = sbr.rel (0) target = $region129
            $region128: #{tpu_custom_call.1} parent=125 // pred_region
              loop: start=0, step=1, limit=1
              $region130: #{tpu_custom_call.1} parent=128 // loop_pre_header
                _
              $region131: #{tpu_custom_call.1} parent=128 // loop_header
                %s482 = sphi 0, %s486
                %p483 = scmp.ge.s32.totalorder %s482, 1
                %s487 = sphi %s13, %s13
                %s488 = sphi [#allocation5], [#allocation5]
              $region132: #{tpu_custom_call.1} parent=128 // loop_header_branch
                %485 = sbr.rel (%p483) target = $region136
              $region133: #{tpu_custom_call.1} parent=128 // loop_body
                %v489 = vld [vmem:[%s487] sm:$0xff]
                %490 = vst [vmem:[%s488] sm:$0xff] %v489
                %v491 = vld [vmem:[%s487 + $0x8] sm:$0xff]
                %492 = vst [vmem:[%s488 + $0x8] sm:$0xff] %v491
                %v493 = vld [vmem:[%s487 + $0x10] sm:$0xff]
                %494 = vst [vmem:[%s488 + $0x10] sm:$0xff] %v493
                %v495 = vld [vmem:[%s487 + $0x18] sm:$0xff]
                %496 = vst [vmem:[%s488 + $0x18] sm:$0xff] %v495
                %v497 = vld [vmem:[%s487 + $0x20] sm:$0xff]
                %498 = vst [vmem:[%s488 + $0x20] sm:$0xff] %v497
                %v499 = vld [vmem:[%s487 + $0x28] sm:$0xff]
                %500 = vst [vmem:[%s488 + $0x28] sm:$0xff] %v499
                %v501 = vld [vmem:[%s487 + $0x30] sm:$0xff]
                %502 = vst [vmem:[%s488 + $0x30] sm:$0xff] %v501
                %v503 = vld [vmem:[%s487 + $0x38] sm:$0xff]
                %504 = vst [vmem:[%s488 + $0x38] sm:$0xff] %v503
              $region134: #{tpu_custom_call.1} parent=128 // loop_footer
                %s486 = sadd.s32 1, %s482
              $region135: #{tpu_custom_call.1} parent=128 // loop_footer_branch
                %481 = sbr.rel target = $region131
              $region136: #{tpu_custom_call.1} parent=128 // loop_exit
                _
            $region129: #{tpu_custom_call.1} parent=125 // pred_fallthru
              _
            // Predicated region
            $region137: #{tpu_custom_call.1} parent=125 // pred_check
              _
            $region138: #{tpu_custom_call.1} parent=125 // pred_check_branch
              %506 = sbr.rel target = $region140
            $region139: #{tpu_custom_call.1} parent=125 // pred_region
              _
            $region140: #{tpu_custom_call.1} parent=125 // pred_fallthru
              _
            // Predicated region
            $region141: #{tpu_custom_call.1} parent=125 // pred_check
              _
            $region142: #{tpu_custom_call.1} parent=125 // pred_check_branch
              %509 = sbr.rel (0) target = $region144
            $region143: #{tpu_custom_call.1} parent=125 // pred_region
              %510 = vsyncadd [#allocation15], 1024
            $region144: #{tpu_custom_call.1} parent=125 // pred_fallthru
              _
            %s511 = smul.u32 4, 16
            %s512 = smul.u32 %s511, 1
            %s513 = sshll.u32 %s512, 4
            %514 = dma.done [#allocation15], %s513
        $region64: #{tpu_custom_call.1} parent=59 // pred_fallthru
          _
        %v515 = vld [vmem:[%s394] sm:$0xff]
        %v516 = vld [vmem:[%s399] sm:$0x1]
        %vm517 = vcmp.ne.s32.totalorder %v516, 0
        %v518 = vsel %vm517, -1e+30, 0.0
        %v519 = vld [vmem:[%s2] sm:$0x1]
        %v520 = vld [vmem:[%s3] sm:$0x1]
        %vm521 = vcmask 261120
        %v522 = vsel %vm521, %v515, 0.0
        %523 = vadd.xlane.f32.xlu0 %v522
        %v524 = vpop.xlane.xlu0 %523
        %v525 = vrcp.pop 32.0
        %v526 = vmul.f32 32.0, %v525
        %v527 = vsub.f32 1.0, %v526
        %v528 = vmul.f32 %v525, %v527
        %v529 = vadd.f32 %v525, %v528
        %vm530 = vweird.f32 %v525
        %v531 = vsel %vm530, %v525, %v529
        %v532 = vmul.f32 %v524, %v531
        %v533 = vsub.f32 %v515, %v532
        %v534 = vmul.f32 %v533, %v533
        %v535 = vsel %vm521, %v534, 0.0
        %536 = vadd.xlane.f32.xlu0 %v535
        %v537 = vpop.xlane.xlu0 %536
        %v538 = vmul.f32 %v537, %v531
        %v539 = vadd.f32 %v538, 1e-05
        %v540 = vrsqrt.pop %v539
        %v541 = vmul.f32 %v540, %v539
        %v542 = vmul.f32 %v541, %v540
        %v543 = vmul.f32 0.5, %v542
        %v544 = vsub.f32 1.5, %v543
        %v545 = vmul.f32 %v540, %v544
        %vm546 = vweird.f32 %v539
        %vm547 = vweird.f32 %v540
        %vm548 = vmor %vm546, %vm547
        %v549 = vsel %vm548, %v540, %v545
        %v550 = vmul.f32 %v533, %v549
        %v552 = vperm.slane %v519, 0
        %v554 = vmul.f32 %v550, %v552
        %v556 = vperm.slane %v520, 0
        %v558 = vadd.f32 %v554, %v556
        %v559 = vpack.c.bf16 %v558, %v558
        %v560 = vld [vmem:[#allocation2] sm:$0xf]
        %v561 = vld [vmem:[#allocation2 + $0x4] sm:$0xf]
        %v562 = vld [vmem:[#allocation2 + $0x8] sm:$0xf]
        %v563 = vld [vmem:[#allocation2 + $0xc] sm:$0xf]
        %v564 = vld [vmem:[%s4] sm:$0x1]
        %v566 = vperm.slane %v564, 0
        %v572 = vunpack.c.l.b16 %v560
        %v573 = vunpack.c.l.b16 %v561
        %v574 = vunpack.c.l.b16 %v562
        %v575 = vunpack.c.l.b16 %v563
        %v576 = vpack.c.b16 %v573, %v572
        %v577 = vpack.c.b16 %v575, %v574
        %v581 = vsel %vm521, %v559, 0
        %583 = vmatpush.bf16.msra.mxu0 0
        %584 = vmatpush.bf16.msra.mxu0 0
        %585 = vmatpush.bf16.msra.mxu0 0
        %586 = vmatpush.bf16.msra.mxu0 0
        %587 = vmatpush.bf16.msra.mxu0 0
        %588 = vmatpush.bf16.msra.mxu0 0
        %589 = vmatpush.bf16.msra.mxu0 %v577
        %590 = vmatpush.bf16.msra.mxu0 %v576
        %591 = vmatmul.bf16.gmra.mxu0 %v581
        %v592 = vpop.f32.mrf.mxu0
        %v593 = vadd.f32 %v566, %v592
        %v594 = vpop.f32.mrf.mxu0
        %595 = vdwg.mxu0
        %v596 = vpack.c.bf16 %v593, %v593
        %v598 = vperm.slane %v518, 0
        %v601 = vunpack.c.l.b16 %v596
        %v602 = vpack.c.b16 %v601, %v601
        %603 = vrot.lane.b32.xlu0 %v602, 96
        %v604 = vpop.permute.xlu0 %603
        %vm605 = vcmask 64512
        %v607 = vsel %vm605, %v596, 0
        %v610 = vsel %vm605, %v604, 0
        %612 = vmatpush.bf16.xpose.msra.mxu0 0
        %613 = vmatpush.bf16.xpose.msra.mxu0 0
        %614 = vmatpush.bf16.xpose.msra.mxu0 0
        %615 = vmatpush.bf16.xpose.msra.mxu0 0
        %616 = vmatpush.bf16.xpose.msra.mxu0 0
        %617 = vmatpush.bf16.xpose.msra.mxu0 0
        %618 = vmatpush.bf16.xpose.msra.mxu0 0
        %619 = vmatpush.bf16.xpose.msra.mxu0 %v610
        %620 = vmatmul.bf16.gmra.mxu0 %v607
        %v621 = vpop.f32.mrf.mxu0
        %v622 = vadd.f32 %v598, %v621
        %v623 = vpop.f32.mrf.mxu0
        %624 = vdwg.mxu0
        %v625 = vsel %vm605, %v622, -inf
        %626 = vmax.xlane.f32.xlu0 %v625
        %v627 = vpop.xlane.xlu0 %626
        %v628 = vsub.f32 %v622, %v627
        %v629 = vmul.f32 %v628, 1.442695
        %v630 = vpow.pop %v629
        %v631 = vsel %vm605, %v630, 0.0
        %632 = vadd.xlane.f32.xlu0 %v631
        %v633 = vpop.xlane.xlu0 %632
        %v634 = vrcp.pop %v633
        %v635 = vmul.f32 %v630, %v634
        %v636 = vpack.c.bf16 %v635, %v635
        %637 = vrot.lane.b32.xlu0 %v602, 64
        %v638 = vpop.permute.xlu0 %637
        %v640 = vsel %vm605, %v636, 0
        %vm642 = vcmask 1043456
        %v644 = vsel %vm642, %v638, 0
        %646 = vmatpush.bf16.msra.mxu0 0
        %647 = vmatpush.bf16.msra.mxu0 0
        %648 = vmatpush.bf16.msra.mxu0 0
        %649 = vmatpush.bf16.msra.mxu0 0
        %650 = vmatpush.bf16.msra.mxu0 0
        %651 = vmatpush.bf16.msra.mxu0 0
        %652 = vmatpush.bf16.msra.mxu0 0
        %653 = vmatpush.bf16.msra.mxu0 %v644
        %654 = vmatmul.bf16.gmra.mxu0 %v640
        %v655 = vpop.f32.mrf.mxu0
        %v656 = vadd.f32 0.0, %v655
        %v657 = vpop.f32.mrf.mxu0
        %658 = vdwg.mxu0
        %v659 = vpack.c.bf16 %v656, %v656
        %vm660 = vcmask 60416
        %661 = vst.msk [vmem:[#allocation6] sm:$0xf] %vm660, %v659
        %662 = vrot.lane.b32.xlu0 %v602, 120
        %v663 = vpop.permute.xlu0 %662
        %664 = vrot.lane.b32.xlu0 %v602, 88
        %v665 = vpop.permute.xlu0 %664
        %v667 = vsel %vm605, %v663, 0
        %v670 = vsel %vm605, %v665, 0
        %672 = vmatpush.bf16.xpose.msra.mxu0 0
        %673 = vmatpush.bf16.xpose.msra.mxu0 0
        %674 = vmatpush.bf16.xpose.msra.mxu0 0
        %675 = vmatpush.bf16.xpose.msra.mxu0 0
        %676 = vmatpush.bf16.xpose.msra.mxu0 0
        %677 = vmatpush.bf16.xpose.msra.mxu0 0
        %678 = vmatpush.bf16.xpose.msra.mxu0 0
        %679 = vmatpush.bf16.xpose.msra.mxu0 %v670
        %680 = vmatmul.bf16.gmra.mxu0 %v667
        %v681 = vpop.f32.mrf.mxu0
        %v682 = vadd.f32 %v598, %v681
        %v683 = vpop.f32.mrf.mxu0
        %684 = vdwg.mxu0
        %v685 = vsel %vm605, %v682, -inf
        %686 = vmax.xlane.f32.xlu0 %v685
        %v687 = vpop.xlane.xlu0 %686
        %v688 = vsub.f32 %v682, %v687
        %v689 = vmul.f32 %v688, 1.442695
        %v690 = vpow.pop %v689
        %v691 = vsel %vm605, %v690, 0.0
        %692 = vadd.xlane.f32.xlu0 %v691
        %v693 = vpop.xlane.xlu0 %692
        %v694 = vrcp.pop %v693
        %v695 = vmul.f32 %v690, %v694
        %v696 = vpack.c.bf16 %v695, %v695
        %697 = vrot.lane.b32.xlu0 %v602, 56
        %v698 = vpop.permute.xlu0 %697
        %v700 = vsel %vm605, %v696, 0
        %v703 = vsel %vm642, %v698, 0
        %705 = vmatpush.bf16.msra.mxu0 0
        %706 = vmatpush.bf16.msra.mxu0 0
        %707 = vmatpush.bf16.msra.mxu0 0
        %708 = vmatpush.bf16.msra.mxu0 0
        %709 = vmatpush.bf16.msra.mxu0 0
        %710 = vmatpush.bf16.msra.mxu0 0
        %711 = vmatpush.bf16.msra.mxu0 0
        %712 = vmatpush.bf16.msra.mxu0 %v703
        %713 = vmatmul.bf16.gmra.mxu0 %v700
        %v714 = vpop.f32.mrf.mxu0
        %v715 = vadd.f32 0.0, %v714
        %v716 = vpop.f32.mrf.mxu0
        %717 = vdwg.mxu0
        %v718 = vpack.c.bf16 %v715, %v715
        %720 = vrot.lane.b32.xlu0 %v718, 8
        %v721 = vpop.permute.xlu0 %720
        %vm723 = vcmask 126016
        %724 = vst.msk [vmem:[#allocation6] sm:$0xf] %vm723, %v721
        %725 = vrot.lane.b32.xlu0 %v602, 112
        %v726 = vpop.permute.xlu0 %725
        %727 = vrot.lane.b32.xlu0 %v602, 80
        %v728 = vpop.permute.xlu0 %727
        %v730 = vsel %vm605, %v726, 0
        %v733 = vsel %vm605, %v728, 0
        %735 = vmatpush.bf16.xpose.msra.mxu0 0
        %736 = vmatpush.bf16.xpose.msra.mxu0 0
        %737 = vmatpush.bf16.xpose.msra.mxu0 0
        %738 = vmatpush.bf16.xpose.msra.mxu0 0
        %739 = vmatpush.bf16.xpose.msra.mxu0 0
        %740 = vmatpush.bf16.xpose.msra.mxu0 0
        %741 = vmatpush.bf16.xpose.msra.mxu0 0
        %742 = vmatpush.bf16.xpose.msra.mxu0 %v733
        %743 = vmatmul.bf16.gmra.mxu0 %v730
        %v744 = vpop.f32.mrf.mxu0
        %v745 = vadd.f32 %v598, %v744
        %v746 = vpop.f32.mrf.mxu0
        %747 = vdwg.mxu0
        %v748 = vsel %vm605, %v745, -inf
        %749 = vmax.xlane.f32.xlu0 %v748
        %v750 = vpop.xlane.xlu0 %749
        %v751 = vsub.f32 %v745, %v750
        %v752 = vmul.f32 %v751, 1.442695
        %v753 = vpow.pop %v752
        %v754 = vsel %vm605, %v753, 0.0
        %755 = vadd.xlane.f32.xlu0 %v754
        %v756 = vpop.xlane.xlu0 %755
        %v757 = vrcp.pop %v756
        %v758 = vmul.f32 %v753, %v757
        %v759 = vpack.c.bf16 %v758, %v758
        %760 = vrot.lane.b32.xlu0 %v602, 48
        %v761 = vpop.permute.xlu0 %760
        %v763 = vsel %vm605, %v759, 0
        %v766 = vsel %vm642, %v761, 0
        %768 = vmatpush.bf16.msra.mxu0 0
        %769 = vmatpush.bf16.msra.mxu0 0
        %770 = vmatpush.bf16.msra.mxu0 0
        %771 = vmatpush.bf16.msra.mxu0 0
        %772 = vmatpush.bf16.msra.mxu0 0
        %773 = vmatpush.bf16.msra.mxu0 0
        %774 = vmatpush.bf16.msra.mxu0 0
        %775 = vmatpush.bf16.msra.mxu0 %v766
        %776 = vmatmul.bf16.gmra.mxu0 %v763
        %v777 = vpop.f32.mrf.mxu0
        %v778 = vadd.f32 0.0, %v777
        %v779 = vpop.f32.mrf.mxu0
        %780 = vdwg.mxu0
        %v781 = vpack.c.bf16 %v778, %v778
        %783 = vrot.lane.b32.xlu0 %v781, 16
        %v784 = vpop.permute.xlu0 %783
        %vm786 = vcmask 191616
        %787 = vst.msk [vmem:[#allocation6] sm:$0xf] %vm786, %v784
        %788 = vrot.lane.b32.xlu0 %v602, 104
        %v789 = vpop.permute.xlu0 %788
        %790 = vrot.lane.b32.xlu0 %v602, 72
        %v791 = vpop.permute.xlu0 %790
        %v793 = vsel %vm605, %v789, 0
        %v796 = vsel %vm605, %v791, 0
        %798 = vmatpush.bf16.xpose.msra.mxu0 0
        %799 = vmatpush.bf16.xpose.msra.mxu0 0
        %800 = vmatpush.bf16.xpose.msra.mxu0 0
        %801 = vmatpush.bf16.xpose.msra.mxu0 0
        %802 = vmatpush.bf16.xpose.msra.mxu0 0
        %803 = vmatpush.bf16.xpose.msra.mxu0 0
        %804 = vmatpush.bf16.xpose.msra.mxu0 0
        %805 = vmatpush.bf16.xpose.msra.mxu0 %v796
        %806 = vmatmul.bf16.gmra.mxu0 %v793
        %v807 = vpop.f32.mrf.mxu0
        %v808 = vadd.f32 %v598, %v807
        %v809 = vpop.f32.mrf.mxu0
        %810 = vdwg.mxu0
        %v811 = vsel %vm605, %v808, -inf
        %812 = vmax.xlane.f32.xlu0 %v811
        %v813 = vpop.xlane.xlu0 %812
        %v814 = vsub.f32 %v808, %v813
        %v815 = vmul.f32 %v814, 1.442695
        %v816 = vpow.pop %v815
        %v817 = vsel %vm605, %v816, 0.0
        %818 = vadd.xlane.f32.xlu0 %v817
        %v819 = vpop.xlane.xlu0 %818
        %v820 = vrcp.pop %v819
        %v821 = vmul.f32 %v816, %v820
        %v822 = vpack.c.bf16 %v821, %v821
        %823 = vrot.lane.b32.xlu0 %v602, 40
        %v824 = vpop.permute.xlu0 %823
        %v826 = vsel %vm605, %v822, 0
        %v829 = vsel %vm642, %v824, 0
        %831 = vmatpush.bf16.msra.mxu0 0
        %832 = vmatpush.bf16.msra.mxu0 0
        %833 = vmatpush.bf16.msra.mxu0 0
        %834 = vmatpush.bf16.msra.mxu0 0
        %835 = vmatpush.bf16.msra.mxu0 0
        %836 = vmatpush.bf16.msra.mxu0 0
        %837 = vmatpush.bf16.msra.mxu0 0
        %838 = vmatpush.bf16.msra.mxu0 %v829
        %839 = vmatmul.bf16.gmra.mxu0 %v826
        %v840 = vpop.f32.mrf.mxu0
        %v841 = vadd.f32 0.0, %v840
        %v842 = vpop.f32.mrf.mxu0
        %843 = vdwg.mxu0
        %v844 = vpack.c.bf16 %v841, %v841
        %846 = vrot.lane.b32.xlu0 %v844, 24
        %v847 = vpop.permute.xlu0 %846
        %vm849 = vcmask 257216
        %850 = vst.msk [vmem:[#allocation6] sm:$0xf] %vm849, %v847
        %v851 = vld [vmem:[#allocation6] sm:$0xf]
        %v852 = vld [vmem:[#allocation3] sm:$0xf]
        %v853 = vld [vmem:[#allocation3 + $0x4] sm:$0xf]
        %v854 = vld [vmem:[#allocation3 + $0x8] sm:$0xf]
        %v855 = vld [vmem:[#allocation3 + $0xc] sm:$0xf]
        %v856 = vld [vmem:[%s5] sm:$0x1]
        %v858 = vperm.slane %v856, 0
        %v864 = vunpack.c.l.b16 %v852
        %v865 = vunpack.c.l.b16 %v853
        %v866 = vunpack.c.l.b16 %v854
        %v867 = vunpack.c.l.b16 %v855
        %v868 = vpack.c.b16 %v865, %v864
        %v869 = vpack.c.b16 %v867, %v866
        %v873 = vsel %vm521, %v851, 0
        %875 = vmatpush.bf16.msra.mxu0 0
        %876 = vmatpush.bf16.msra.mxu0 0
        %877 = vmatpush.bf16.msra.mxu0 0
        %878 = vmatpush.bf16.msra.mxu0 0
        %879 = vmatpush.bf16.msra.mxu0 0
        %880 = vmatpush.bf16.msra.mxu0 0
        %881 = vmatpush.bf16.msra.mxu0 %v869
        %882 = vmatpush.bf16.msra.mxu0 %v868
        %883 = vmatmul.bf16.gmra.mxu0 %v873
        %v884 = vpop.f32.mrf.mxu0
        %v885 = vadd.f32 %v858, %v884
        %v886 = vpop.f32.mrf.mxu0
        %887 = vdwg.mxu0
        %v888 = vadd.f32 %v515, %v885
        %v889 = vld [vmem:[%s6] sm:$0x1]
        %v890 = vld [vmem:[%s7] sm:$0x1]
        %v891 = vsel %vm521, %v888, 0.0
        %892 = vadd.xlane.f32.xlu0 %v891
        %v893 = vpop.xlane.xlu0 %892
        %v894 = vmul.f32 %v893, %v531
        %v895 = vsub.f32 %v888, %v894
        %v896 = vmul.f32 %v895, %v895
        %v897 = vsel %vm521, %v896, 0.0
        %898 = vadd.xlane.f32.xlu0 %v897
        %v899 = vpop.xlane.xlu0 %898
        %v900 = vmul.f32 %v899, %v531
        %v901 = vadd.f32 %v900, 1e-05
        %v902 = vrsqrt.pop %v901
        %v903 = vmul.f32 %v902, %v901
        %v904 = vmul.f32 %v903, %v902
        %v905 = vmul.f32 0.5, %v904
        %v906 = vsub.f32 1.5, %v905
        %v907 = vmul.f32 %v902, %v906
        %vm908 = vweird.f32 %v901
        %vm909 = vweird.f32 %v902
        %vm910 = vmor %vm908, %vm909
        %v911 = vsel %vm910, %v902, %v907
        %v912 = vmul.f32 %v895, %v911
        %v914 = vperm.slane %v889, 0
        %v916 = vmul.f32 %v912, %v914
        %v918 = vperm.slane %v890, 0
        %v920 = vadd.f32 %v916, %v918
        %v921 = vpack.c.bf16 %v920, %v920
        %v922 = vld [vmem:[#allocation4] sm:$0xf]
        %v923 = vld [vmem:[#allocation4 + $0x4] sm:$0xf]
        %v924 = vld [vmem:[#allocation4 + $0x8] sm:$0xf]
        %v925 = vld [vmem:[#allocation4 + $0xc] sm:$0xf]
        %v926 = vld [vmem:[%s8] sm:$0x1]
        %v928 = vperm.slane %v926, 0
        %v934 = vunpack.c.l.b16 %v922
        %v935 = vunpack.c.l.b16 %v923
        %v936 = vunpack.c.l.b16 %v924
        %v937 = vunpack.c.l.b16 %v925
        %v938 = vpack.c.b16 %v935, %v934
        %v939 = vpack.c.b16 %v937, %v936
        %v943 = vsel %vm521, %v921, 0
        %945 = vmatpush.bf16.msra.mxu0 0
        %946 = vmatpush.bf16.msra.mxu0 0
        %947 = vmatpush.bf16.msra.mxu0 0
        %948 = vmatpush.bf16.msra.mxu0 0
        %949 = vmatpush.bf16.msra.mxu0 0
        %950 = vmatpush.bf16.msra.mxu0 0
        %951 = vmatpush.bf16.msra.mxu0 %v939
        %952 = vmatpush.bf16.msra.mxu0 %v938
        %953 = vmatmul.bf16.gmra.mxu0 %v943
        %v954 = vpop.f32.mrf.mxu0
        %v955 = vadd.f32 %v928, %v954
        %v956 = vpop.f32.mrf.mxu0
        %957 = vdwg.mxu0
        %v958 = vmul.f32 %v955, 1.702
        %v959 = vxor.u32 %v958, 2147483648
        %v960 = vmul.f32 %v959, 1.442695
        %v961 = vpow.pop %v960
        %v962 = vadd.f32 %v961, 1.0
        %v963 = vrcp.pop %v962
        %v964 = vmul.f32 %v962, %v963
        %v965 = vsub.f32 1.0, %v964
        %v966 = vmul.f32 %v963, %v965
        %v967 = vadd.f32 %v963, %v966
        %vm968 = vweird.f32 %v962
        %vm969 = vweird.f32 %v963
        %vm970 = vmor %vm968, %vm969
        %v971 = vsel %vm970, %v963, %v967
        %v972 = vand.u32 2147483647, %v962
        %vm973 = vcmp.eq.f32.partialorder %v972, 8.507059e+37
        %v974 = vand.u32 %v962, 2147483648
        %v975 = vor.u32 1.1754944e-38, %v974
        %v976 = vsel %vm973, %v975, %v971
        %v977 = vmul.f32 1.0, %v976
        %v978 = vmul.f32 %v955, %v977
        %v979 = vpack.c.bf16 %v978, %v978
        %v980 = vld [vmem:[#allocation5] sm:$0xf]
        %v981 = vld [vmem:[#allocation5 + $0x4] sm:$0xf]
        %v982 = vld [vmem:[#allocation5 + $0x8] sm:$0xf]
        %v983 = vld [vmem:[#allocation5 + $0xc] sm:$0xf]
        %v984 = vld [vmem:[#allocation5 + $0x10] sm:$0xf]
        %v985 = vld [vmem:[#allocation5 + $0x14] sm:$0xf]
        %v986 = vld [vmem:[#allocation5 + $0x18] sm:$0xf]
        %v987 = vld [vmem:[#allocation5 + $0x1c] sm:$0xf]
        %v988 = vld [vmem:[#allocation5 + $0x20] sm:$0xf]
        %v989 = vld [vmem:[#allocation5 + $0x24] sm:$0xf]
        %v990 = vld [vmem:[#allocation5 + $0x28] sm:$0xf]
        %v991 = vld [vmem:[#allocation5 + $0x2c] sm:$0xf]
        %v992 = vld [vmem:[#allocation5 + $0x30] sm:$0xf]
        %v993 = vld [vmem:[#allocation5 + $0x34] sm:$0xf]
        %v994 = vld [vmem:[#allocation5 + $0x38] sm:$0xf]
        %v995 = vld [vmem:[#allocation5 + $0x3c] sm:$0xf]
        %v996 = vld [vmem:[%s9] sm:$0x1]
        %v998 = vperm.slane %v996, 0
        %v1016 = vunpack.c.l.b16 %v980
        %v1017 = vunpack.c.l.b16 %v981
        %v1018 = vunpack.c.l.b16 %v982
        %v1019 = vunpack.c.l.b16 %v983
        %v1020 = vunpack.c.l.b16 %v984
        %v1021 = vunpack.c.l.b16 %v985
        %v1022 = vunpack.c.l.b16 %v986
        %v1023 = vunpack.c.l.b16 %v987
        %v1024 = vunpack.c.l.b16 %v988
        %v1025 = vunpack.c.l.b16 %v989
        %v1026 = vunpack.c.l.b16 %v990
        %v1027 = vunpack.c.l.b16 %v991
        %v1028 = vunpack.c.l.b16 %v992
        %v1029 = vunpack.c.l.b16 %v993
        %v1030 = vunpack.c.l.b16 %v994
        %v1031 = vunpack.c.l.b16 %v995
        %v1032 = vpack.c.b16 %v1017, %v1016
        %v1033 = vpack.c.b16 %v1019, %v1018
        %v1034 = vpack.c.b16 %v1021, %v1020
        %v1035 = vpack.c.b16 %v1023, %v1022
        %v1036 = vpack.c.b16 %v1025, %v1024
        %v1037 = vpack.c.b16 %v1027, %v1026
        %v1038 = vpack.c.b16 %v1029, %v1028
        %v1039 = vpack.c.b16 %v1031, %v1030
        %1048 = vmatpush.bf16.msra.mxu0 %v1039
        %1049 = vmatpush.bf16.msra.mxu0 %v1038
        %1050 = vmatpush.bf16.msra.mxu0 %v1037
        %1051 = vmatpush.bf16.msra.mxu0 %v1036
        %1052 = vmatpush.bf16.msra.mxu0 %v1035
        %1053 = vmatpush.bf16.msra.mxu0 %v1034
        %1054 = vmatpush.bf16.msra.mxu0 %v1033
        %1055 = vmatpush.bf16.msra.mxu0 %v1032
        %1056 = vmatmul.bf16.gmra.mxu0 %v979
        %v1057 = vpop.f32.mrf.mxu0
        %v1058 = vadd.f32 %v998, %v1057
        %v1059 = vpop.f32.mrf.mxu0
        %1060 = vdwg.mxu0
        %v1061 = vadd.f32 %v888, %v1058
        %1062 = vst.msk [vmem:[%s389] sm:$0xff] %vm521, %v1061
        %s1063 = sand.u32 %s274, 1
        %s1064 = scalar_lea.sflag [#allocation8], %s1063
        %s1065 = sand.u32 %s274, 1
        %s1066 = smul.addr %s1065, 8
        %s1067 = scalar_lea.vmem [#allocation7], %s1066
        // Predicated region
        $region145: #{tpu_custom_call.1} parent=59 // pred_check
          %p1068 = pneg %p284
        $region146: #{tpu_custom_call.1} parent=59 // pred_check_branch
          %1070 = sbr.rel (%p1068) target = $region148
        $region147: #{tpu_custom_call.1} parent=59 // pred_region
          %s1071 = sadd.s32 %s32, %s33
          %1073 = vsyncadd %s1064, 0
          %s1074 = smul.addr %s1071, 8
          %s1075 = scalar_lea.hbm %s14, %s1074
          %s1077 = sshll.u32 %s1067, 4
          %s1078 = int_to_ptr.vmem [resolvable:$true] %s1077
          %s1079 = sshll.u32 %s1075, 4
          %s1080 = int_to_ptr.hbm [resolvable:$true] %s1079
          %1082 = dma.vmem_to_hbm [thread:$0]  %s1078, 128, %s1080, %s1064
        $region148: #{tpu_custom_call.1} parent=59 // pred_fallthru
          _
      $region60: #{tpu_custom_call.1} parent=5 // pred_fallthru
        _
      %p1083 = scmp.le.s32.totalorder 2, %s23
      // Predicated region
      $region149: #{tpu_custom_call.1} parent=5 // pred_check
        %p1084 = pneg %p1083
      $region150: #{tpu_custom_call.1} parent=5 // pred_check_branch
        %1086 = sbr.rel (%p1084) target = $region152
      $region151: #{tpu_custom_call.1} parent=5 // pred_region
        %s1087 = ssub.s32 %s23, 2
        // Predicated region
        $region153: #{tpu_custom_call.1} parent=151 // pred_check
          %p1088 = pneg %p290
        $region154: #{tpu_custom_call.1} parent=151 // pred_check_branch
          %1090 = sbr.rel (%p1088) target = $region156
        $region155: #{tpu_custom_call.1} parent=151 // pred_region
          %s1091 = sand.u32 %s275, 1
          %s1092 = scalar_lea.sflag [#allocation8], %s1091
          %s1093 = sand.u32 %s275, 1
          %s1094 = smul.addr %s1093, 8
          %s1095 = scalar_lea.vmem [#allocation7], %s1094
          %1097 = dma.done %s1092, 128
        $region156: #{tpu_custom_call.1} parent=151 // pred_fallthru
          _
      $region152: #{tpu_custom_call.1} parent=5 // pred_fallthru
        _
    $region6: #{tpu_custom_call.1} parent=1 // loop_footer
      %s27 = sadd.s32 1, %s23
    $region7: #{tpu_custom_call.1} parent=1 // loop_footer_branch
      %22 = sbr.rel target = $region3
    $region8: #{tpu_custom_call.1} parent=1 // loop_exit
      _
    %1098 = vsyncpa [#allocation8], 1
    %s1099 = scalar_lea.sflag [#allocation8], 1
    %1100 = vsyncpa %s1099, 1

</llo_original>
